<compile_context>
chip_gen: v7x
topology: tpu7x:2x2x1
jax: 0.10.0
libtpu: 0.0.40
codegen_flags: <defaults>
</compile_context>

<pallas_src>
import functools
import math

import jax
import jax.numpy as jnp
from jax.experimental import pallas as pl
from jax.experimental.pallas import tpu as pltpu


# ----------------------------- Pallas kernel --------------------------------

def _pq_attention_kernel(q_ref, k1_ref, k2_ref,
                         wq_ref, wk1_ref, wk2_ref,
                         w1a_ref, w1b_ref, w2_ref,
                         o_ref, *, compute_dtype):
    cd = compute_dtype
    G, Sq, H = q_ref.shape
    _, Sk, _ = k1_ref.shape
    Hh = wq_ref.shape[1]

    Q = q_ref[...]       # (G, Sq, H)
    K1 = k1_ref[...]     # (G, Sk, H)
    K2 = k2_ref[...]     # (G, Sk, H)

    # --- Projections: batch-flattened so each weight gets ONE MXU pass/step.
    #     Weights are (in, out); 1/sqrt(H) is folded into wq at prep time.
    Qf = Q.reshape(G * Sq, H).astype(cd)
    K1f = K1.reshape(G * Sk, H).astype(cd)
    K2f = K2.reshape(G * Sk, H).astype(cd)

    Qp = jnp.dot(Qf, wq_ref[...],
                 preferred_element_type=jnp.float32).reshape(G, Sq, Hh)
    K1p = jnp.dot(K1f, wk1_ref[...],
                  preferred_element_type=jnp.float32).reshape(G, Sk, Hh)
    K2p = jnp.dot(K2f, wk2_ref[...],
                  preferred_element_type=jnp.float32).reshape(G, Sk, Hh)

    # --- Merged score / softmax / value path: stack the two attention heads
    #     along the batch axis -> one batched einsum + one softmax pass covers
    #     both, with per-row normalization kept exactly as in the module.
    Qp2 = jnp.concatenate([Qp, Qp], axis=0).astype(cd)        # (2G, Sq, Hh)
    Kp2 = jnp.concatenate([K1p, K2p], axis=0).astype(cd)      # (2G, Sk, Hh)
    Kv2 = jnp.concatenate([K1, K2], axis=0).astype(cd)        # (2G, Sk, H)

    s = jnp.einsum('bqh,bkh->bqk', Qp2, Kp2,
                   preferred_element_type=jnp.float32)        # (2G, Sq, Sk)
    m = jnp.max(s, axis=-1, keepdims=True)
    e = jnp.exp(s - m)
    inv = pl.reciprocal(jnp.sum(e, axis=-1, keepdims=True), approx=True)
    a = (e * inv).astype(cd)                                  # (2G, Sq, Sk)

    o = jnp.einsum('bqk,bkh->bqh', a, Kv2,
                   preferred_element_type=jnp.float32)        # (2G, Sq, H)

    o1 = o[:G].reshape(G * Sq, H).astype(cd)                  # attn_output1
    o2 = o[G:].reshape(G * Sq, H).astype(cd)                  # attn_output2

    # --- MLP1 without the lane-axis concat: w_mlp1 split into halves so
    #     concat([o1,o2]) @ W1 == o1 @ W1a + o2 @ W1b (two MXU passes + VPU add).
    h = (jnp.dot(o1, w1a_ref[...], preferred_element_type=jnp.float32) +
         jnp.dot(o2, w1b_ref[...], preferred_element_type=jnp.float32))
    h = jnp.maximum(h, 0.0).astype(cd)                        # (G*Sq, Hh)

    out = jnp.dot(h, w2_ref[...], preferred_element_type=jnp.float32)

    # One consolidated slab store per grid step.
    o_ref[...] = out.reshape(G, Sq, H).astype(o_ref.dtype)


# --------------------------- parameter preparation --------------------------

def prepare_pq_attention_params(wq, wk1, wk2, w_mlp1, w_mlp2, hidden,
                                compute_dtype=jnp.float32):
    """One-time weight prep (call once, outside the hot path).

    Inputs are dense PyTorch-Linear-layout (out, in) weights (already
    dequantized from the PQ codebooks).  Returns (in, out)-layout weights with
    the 1/sqrt(H) softmax scale folded into wq and w_mlp1 split into halves.
    """
    H = hidden
    scale = 1.0 / math.sqrt(float(H))
    return {
        "wq_t": (wq * scale).T.astype(compute_dtype),    # (H, H/2)
        "wk1_t": wk1.T.astype(compute_dtype),            # (H, H/2)
        "wk2_t": wk2.T.astype(compute_dtype),            # (H, H/2)
        "w1a": w_mlp1[:, :H].T.astype(compute_dtype),    # (H, H/2)  acts on o1
        "w1b": w_mlp1[:, H:].T.astype(compute_dtype),    # (H, H/2)  acts on o2
        "w2_t": w_mlp2.T.astype(compute_dtype),          # (H/2, H)
    }


def _default_num_steps(batch):
    """2 grid steps on v7x (2 TensorCores/chip), 1 step otherwise."""
    try:
        kind = jax.devices()[0].device_kind.lower()
    except Exception:
        kind = ""
    if "v7" in kind and batch >= 2 and batch % 2 == 0:
        return 2
    return 1


# ------------------------------ hot-path forward -----------------------------

def pq_attention_forward(Q, K1, K2, params, *, num_steps=None,
                         compute_dtype=jnp.float32):
    """Batched PQAttention forward.

    Q: (B, Sq, H); K1/K2: (B, Sk, H); `params` from prepare_pq_attention_params.
    Each batch element reproduces the PyTorch module's 2-D forward.
    """
    B, Sq, H = Q.shape
    _, Sk, _ = K1.shape
    Hh = params["wq_t"].shape[1]

    if num_steps is None:
        num_steps = _default_num_steps(B)
    if B % num_steps != 0:
        num_steps = 1
    G = B // num_steps            # batch elements per grid step

    kernel = functools.partial(_pq_attention_kernel, compute_dtype=compute_dtype)

    return pl.pallas_call(
        kernel,
        out_shape=jax.ShapeDtypeStruct((B, Sq, H), jnp.float32),
        grid=(num_steps,),
        in_specs=[
            pl.BlockSpec((G, Sq, H), lambda g: (g, 0, 0)),   # Q
            pl.BlockSpec((G, Sk, H), lambda g: (g, 0, 0)),   # K1
            pl.BlockSpec((G, Sk, H), lambda g: (g, 0, 0)),   # K2
            # Weights: constant index_map -> VMEM-resident across the grid.
            pl.BlockSpec((H, Hh), lambda g: (0, 0)),         # wq (scaled, T)
            pl.BlockSpec((H, Hh), lambda g: (0, 0)),         # wk1 (T)
            pl.BlockSpec((H, Hh), lambda g: (0, 0)),         # wk2 (T)
            pl.BlockSpec((H, Hh), lambda g: (0, 0)),         # w_mlp1 half A (T)
            pl.BlockSpec((H, Hh), lambda g: (0, 0)),         # w_mlp1 half B (T)
            pl.BlockSpec((Hh, H), lambda g: (0, 0)),         # w_mlp2 (T)
        ],
        out_specs=pl.BlockSpec((G, Sq, H), lambda g: (g, 0, 0)),
        compiler_params=pltpu.CompilerParams(
            dimension_semantics=("parallel",)),
    )(Q, K1, K2,
      params["wq_t"], params["wk1_t"], params["wk2_t"],
      params["w1a"], params["w1b"], params["w2_t"])


# ------------------------- PQ weight de-quantization ------------------------
# (data-dependent codebook gather; done once in plain JAX, not in the kernel)

def make_pq_linear_params(key, in_features, out_features,
                          num_subvectors, num_centroids):
    assert in_features % num_subvectors == 0
    sub_dim = in_features // num_subvectors
    keys = jax.random.split(key, num_subvectors + 1)
    codebooks = [jax.random.normal(keys[i], (num_centroids, sub_dim), jnp.float32)
                 for i in range(num_subvectors)]
    assignments = jax.random.randint(keys[-1], (out_features, num_subvectors),
                                     0, num_centroids, jnp.int32)
    return codebooks, assignments


def dequantize_pq_weight(codebooks, assignments):
    # Dense weight of shape (out_features, in_features), PyTorch Linear layout.
    parts = [codebooks[i][assignments[:, i]] for i in range(len(codebooks))]
    return jnp.concatenate(parts, axis=1)


# --------------------------------- main --------------------------------------

if __name__ == "__main__":
    hidden = 32          # config.hidden_size
    seq_q = 8
    seq_k = 8
    batch = 4            # independent problems batched into one pallas_call
    num_subvectors = 4
    num_centroids = 256

    root = jax.random.PRNGKey(0)
    k_q, k_k1, k_k2, k_wq, k_wk1, k_wk2, k_m1, k_m2 = jax.random.split(root, 8)

    # inputs (batch of independent 2-D problems)
    Q = jax.random.normal(k_q, (batch, seq_q, hidden), jnp.float32)
    K1 = jax.random.normal(k_k1, (batch, seq_k, hidden), jnp.float32)
    K2 = jax.random.normal(k_k2, (batch, seq_k, hidden), jnp.float32)

    # PQ parameters -> dense weights (out, in)
    wq = dequantize_pq_weight(*make_pq_linear_params(
        k_wq, hidden, hidden // 2, num_subvectors, num_centroids))
    wk1 = dequantize_pq_weight(*make_pq_linear_params(
        k_wk1, hidden, hidden // 2, num_subvectors, num_centroids))
    wk2 = dequantize_pq_weight(*make_pq_linear_params(
        k_wk2, hidden, hidden // 2, num_subvectors, num_centroids))
    w_mlp1 = dequantize_pq_weight(*make_pq_linear_params(
        k_m1, 2 * hidden, hidden // 2, num_subvectors, num_centroids))
    w_mlp2 = dequantize_pq_weight(*make_pq_linear_params(
        k_m2, hidden // 2, hidden, num_subvectors, num_centroids))

    # One-time weight prep, hoisted out of the hot path.
    params = prepare_pq_attention_params(wq, wk1, wk2, w_mlp1, w_mlp2, hidden)
    params = jax.tree_util.tree_map(jax.block_until_ready, params)

    out = pq_attention_forward(Q, K1, K2, params)
    out = jax.block_until_ready(out)

    # pure-JAX reference (matches the PyTorch module per batch element)
    def ref(Q, K1, K2):
        Qp = jnp.einsum('bsh,oh->bso', Q, wq)
        K1p = jnp.einsum('bsh,oh->bso', K1, wk1)
        K2p = jnp.einsum('bsh,oh->bso', K2, wk2)
        s1 = jnp.einsum('bqo,bko->bqk', Qp, K1p) / math.sqrt(hidden)
        s2 = jnp.einsum('bqo,bko->bqk', Qp, K2p) / math.sqrt(hidden)
        a1 = jax.nn.softmax(s1, axis=-1)
        a2 = jax.nn.softmax(s2, axis=-1)
        o1 = jnp.einsum('bqk,bkh->bqh', a1, K1)
        o2 = jnp.einsum('bqk,bkh->bqh', a2, K2)
        fused = jnp.concatenate([o1, o2], axis=-1)
        h = jnp.maximum(jnp.einsum('bqf,of->bqo', fused, w_mlp1), 0.0)
        return jnp.einsum('bqo,ho->bqh', h, w_mlp2)

    ref_out = jax.block_until_ready(ref(Q, K1, K2))
    assert out.shape == (batch, seq_q, hidden)
    err = float(jnp.max(jnp.abs(out - ref_out)) /
                (jnp.max(jnp.abs(ref_out)) + 1e-6))
    assert err < 2e-2, f"max relative error too large: {err}"

    print("KERNEL_OK")
</pallas_src>

<mosaic_0001>
module attributes {stable_mosaic.version = 11 : i64} {
  func.func @_pq_attention_kernel(%arg0: i32, %arg1: memref<4x8x32xf32, #tpu.memory_space<vmem>>, %arg2: memref<4x8x32xf32, #tpu.memory_space<vmem>>, %arg3: memref<4x8x32xf32, #tpu.memory_space<vmem>>, %arg4: memref<32x16xf32, #tpu.memory_space<vmem>>, %arg5: memref<32x16xf32, #tpu.memory_space<vmem>>, %arg6: memref<32x16xf32, #tpu.memory_space<vmem>>, %arg7: memref<32x16xf32, #tpu.memory_space<vmem>>, %arg8: memref<32x16xf32, #tpu.memory_space<vmem>>, %arg9: memref<16x32xf32, #tpu.memory_space<vmem>>, %arg10: memref<4x8x32xf32, #tpu.memory_space<vmem>>) attributes {dimension_semantics = [#tpu.dimension_semantics<parallel>], iteration_bounds = array<i64: 1>, scalar_prefetch = 0 : i64, scratch_operands = 0 : i64, tpu.core_type = #tpu.core_type<tc>, window_params = [{transform_indices = @transform_0, window_bounds = array<i64: 4, 8, 32>}, {transform_indices = @transform_1, window_bounds = array<i64: 4, 8, 32>}, {transform_indices = @transform_2, window_bounds = array<i64: 4, 8, 32>}, {pipeline_mode = #tpu.pipeline_mode<synchronous>, transform_indices = @transform_3, window_bounds = array<i64: 32, 16>}, {pipeline_mode = #tpu.pipeline_mode<synchronous>, transform_indices = @transform_4, window_bounds = array<i64: 32, 16>}, {pipeline_mode = #tpu.pipeline_mode<synchronous>, transform_indices = @transform_5, window_bounds = array<i64: 32, 16>}, {pipeline_mode = #tpu.pipeline_mode<synchronous>, transform_indices = @transform_6, window_bounds = array<i64: 32, 16>}, {pipeline_mode = #tpu.pipeline_mode<synchronous>, transform_indices = @transform_7, window_bounds = array<i64: 32, 16>}, {pipeline_mode = #tpu.pipeline_mode<synchronous>, transform_indices = @transform_8, window_bounds = array<i64: 16, 32>}, {transform_indices = @transform_9, window_bounds = array<i64: 4, 8, 32>}]} {
    %c0 = arith.constant 0 : index
    %c0_0 = arith.constant 0 : index
    %c0_1 = arith.constant 0 : index
    %0 = vector.load %arg1[%c0, %c0_0, %c0_1] : memref<4x8x32xf32, #tpu.memory_space<vmem>>, vector<4x8x32xf32>
    %c0_2 = arith.constant 0 : index
    %c0_3 = arith.constant 0 : index
    %c0_4 = arith.constant 0 : index
    %1 = vector.load %arg2[%c0_2, %c0_3, %c0_4] : memref<4x8x32xf32, #tpu.memory_space<vmem>>, vector<4x8x32xf32>
    %c0_5 = arith.constant 0 : index
    %c0_6 = arith.constant 0 : index
    %c0_7 = arith.constant 0 : index
    %2 = vector.load %arg3[%c0_5, %c0_6, %c0_7] : memref<4x8x32xf32, #tpu.memory_space<vmem>>, vector<4x8x32xf32>
    %3 = vector.shape_cast %0 : vector<4x8x32xf32> to vector<32x32xf32>
    %4 = vector.shape_cast %1 : vector<4x8x32xf32> to vector<32x32xf32>
    %5 = vector.shape_cast %2 : vector<4x8x32xf32> to vector<32x32xf32>
    %c0_8 = arith.constant 0 : index
    %c0_9 = arith.constant 0 : index
    %6 = vector.load %arg4[%c0_8, %c0_9] : memref<32x16xf32, #tpu.memory_space<vmem>>, vector<32x16xf32>
    %cst = arith.constant dense<0.000000e+00> : vector<32x16xf32>
    %7 = tpu.matmul %3, %6, %cst {dimension_numbers = #tpu.dot_dimension_numbers<[1], [0], [0], [1], [0, 0, 1, 1], [], []>} : vector<32x32xf32>, vector<32x16xf32>, vector<32x16xf32> -> vector<32x16xf32>
    %8 = vector.shape_cast %7 : vector<32x16xf32> to vector<4x8x16xf32>
    %c0_10 = arith.constant 0 : index
    %c0_11 = arith.constant 0 : index
    %9 = vector.load %arg5[%c0_10, %c0_11] : memref<32x16xf32, #tpu.memory_space<vmem>>, vector<32x16xf32>
    %cst_12 = arith.constant dense<0.000000e+00> : vector<32x16xf32>
    %10 = tpu.matmul %4, %9, %cst_12 {dimension_numbers = #tpu.dot_dimension_numbers<[1], [0], [0], [1], [0, 0, 1, 1], [], []>} : vector<32x32xf32>, vector<32x16xf32>, vector<32x16xf32> -> vector<32x16xf32>
    %11 = vector.shape_cast %10 : vector<32x16xf32> to vector<4x8x16xf32>
    %c0_13 = arith.constant 0 : index
    %c0_14 = arith.constant 0 : index
    %12 = vector.load %arg6[%c0_13, %c0_14] : memref<32x16xf32, #tpu.memory_space<vmem>>, vector<32x16xf32>
    %cst_15 = arith.constant dense<0.000000e+00> : vector<32x16xf32>
    %13 = tpu.matmul %5, %12, %cst_15 {dimension_numbers = #tpu.dot_dimension_numbers<[1], [0], [0], [1], [0, 0, 1, 1], [], []>} : vector<32x32xf32>, vector<32x16xf32>, vector<32x16xf32> -> vector<32x16xf32>
    %14 = vector.shape_cast %13 : vector<32x16xf32> to vector<4x8x16xf32>
    %15 = tpu.concatenate %8, %8 in 0 : vector<4x8x16xf32>, vector<4x8x16xf32> -> vector<8x8x16xf32>
    %16 = tpu.concatenate %11, %14 in 0 : vector<4x8x16xf32>, vector<4x8x16xf32> -> vector<8x8x16xf32>
    %17 = tpu.concatenate %1, %2 in 0 : vector<4x8x32xf32>, vector<4x8x32xf32> -> vector<8x8x32xf32>
    "tpu.trace_start"() <{level = 10 : i32, message = "bqh,bkh->bqk"}> : () -> ()
    %cst_16 = arith.constant dense<0.000000e+00> : vector<8x8x8xf32>
    %18 = tpu.matmul %15, %16, %cst_16 {dimension_numbers = #tpu.dot_dimension_numbers<[2], [2], [1], [1], [0, 0, 0, 1, 1, 1], [0], [0]>} : vector<8x8x16xf32>, vector<8x8x16xf32>, vector<8x8x8xf32> -> vector<8x8x8xf32>
    "tpu.trace_stop"() : () -> ()
    %cst_17 = arith.constant dense<0xFF800000> : vector<8x8xf32>
    %19 = vector.multi_reduction <maximumf>, %18, %cst_17 [2] : vector<8x8x8xf32> to vector<8x8xf32>
    %20 = vector.shape_cast %19 : vector<8x8xf32> to vector<8x8x1xf32>
    %21 = vector.broadcast %20 : vector<8x8x1xf32> to vector<8x8x8xf32>
    %22 = arith.subf %18, %21 : vector<8x8x8xf32>
    %23 = math.exp %22 : vector<8x8x8xf32>
    %cst_18 = arith.constant dense<0.000000e+00> : vector<8x8xf32>
    %24 = vector.multi_reduction <add>, %23, %cst_18 [2] : vector<8x8x8xf32> to vector<8x8xf32>
    %25 = vector.shape_cast %24 : vector<8x8xf32> to vector<8x8x1xf32>
    %26 = tpu.reciprocal %25 {approx = true} : vector<8x8x1xf32> -> vector<8x8x1xf32>
    %27 = vector.broadcast %26 : vector<8x8x1xf32> to vector<8x8x8xf32>
    %28 = arith.mulf %23, %27 : vector<8x8x8xf32>
    "tpu.trace_start"() <{level = 10 : i32, message = "bqk,bkh->bqh"}> : () -> ()
    %cst_19 = arith.constant dense<0.000000e+00> : vector<8x8x32xf32>
    %29 = tpu.matmul %28, %17, %cst_19 {dimension_numbers = #tpu.dot_dimension_numbers<[2], [1], [1], [2], [0, 0, 0, 1, 1, 2], [0], [0]>} : vector<8x8x8xf32>, vector<8x8x32xf32>, vector<8x8x32xf32> -> vector<8x8x32xf32>
    "tpu.trace_stop"() : () -> ()
    %30 = vector.extract_strided_slice %29 {offsets = [0, 0, 0], sizes = [4, 8, 32], strides = [1, 1, 1]} : vector<8x8x32xf32> to vector<4x8x32xf32>
    %31 = vector.shape_cast %30 : vector<4x8x32xf32> to vector<32x32xf32>
    %32 = vector.extract_strided_slice %29 {offsets = [4, 0, 0], sizes = [4, 8, 32], strides = [1, 1, 1]} : vector<8x8x32xf32> to vector<4x8x32xf32>
    %33 = vector.shape_cast %32 : vector<4x8x32xf32> to vector<32x32xf32>
    %c0_20 = arith.constant 0 : index
    %c0_21 = arith.constant 0 : index
    %34 = vector.load %arg7[%c0_20, %c0_21] : memref<32x16xf32, #tpu.memory_space<vmem>>, vector<32x16xf32>
    %cst_22 = arith.constant dense<0.000000e+00> : vector<32x16xf32>
    %35 = tpu.matmul %31, %34, %cst_22 {dimension_numbers = #tpu.dot_dimension_numbers<[1], [0], [0], [1], [0, 0, 1, 1], [], []>} : vector<32x32xf32>, vector<32x16xf32>, vector<32x16xf32> -> vector<32x16xf32>
    %c0_23 = arith.constant 0 : index
    %c0_24 = arith.constant 0 : index
    %36 = vector.load %arg8[%c0_23, %c0_24] : memref<32x16xf32, #tpu.memory_space<vmem>>, vector<32x16xf32>
    %cst_25 = arith.constant dense<0.000000e+00> : vector<32x16xf32>
    %37 = tpu.matmul %33, %36, %cst_25 {dimension_numbers = #tpu.dot_dimension_numbers<[1], [0], [0], [1], [0, 0, 1, 1], [], []>} : vector<32x32xf32>, vector<32x16xf32>, vector<32x16xf32> -> vector<32x16xf32>
    %38 = arith.addf %35, %37 : vector<32x16xf32>
    %cst_26 = arith.constant 0.000000e+00 : f32
    %39 = vector.broadcast %cst_26 : f32 to vector<32x16xf32>
    %40 = arith.maximumf %38, %39 : vector<32x16xf32>
    %c0_27 = arith.constant 0 : index
    %c0_28 = arith.constant 0 : index
    %41 = vector.load %arg9[%c0_27, %c0_28] : memref<16x32xf32, #tpu.memory_space<vmem>>, vector<16x32xf32>
    %cst_29 = arith.constant dense<0.000000e+00> : vector<32x32xf32>
    %42 = tpu.matmul %40, %41, %cst_29 {dimension_numbers = #tpu.dot_dimension_numbers<[1], [0], [0], [1], [0, 0, 1, 1], [], []>} : vector<32x16xf32>, vector<16x32xf32>, vector<32x32xf32> -> vector<32x32xf32>
    %43 = vector.shape_cast %42 : vector<32x32xf32> to vector<4x8x32xf32>
    %c0_30 = arith.constant 0 : index
    %c0_31 = arith.constant 0 : index
    %c0_32 = arith.constant 0 : index
    %44 = vector.load %arg10[%c0_30, %c0_31, %c0_32] : memref<4x8x32xf32, #tpu.memory_space<vmem>>, vector<4x8x32xf32>
    tpu.vector_store %arg10[%c0_30, %c0_31, %c0_32], %43 {strides = array<i32>} : memref<4x8x32xf32, #tpu.memory_space<vmem>>, vector<4x8x32xf32>,
    return
  }
  func.func @transform_0(%arg0: i32) -> (i32, i32, i32) {
    %c0_i32 = arith.constant 0 : i32
    %c0_i32_0 = arith.constant 0 : i32
    %c0_i32_1 = arith.constant 0 : i32
    return %arg0, %c0_i32, %c0_i32_0 : i32, i32, i32
  }
  func.func @transform_1(%arg0: i32) -> (i32, i32, i32) {
    %c0_i32 = arith.constant 0 : i32
    %c0_i32_0 = arith.constant 0 : i32
    %c0_i32_1 = arith.constant 0 : i32
    return %arg0, %c0_i32, %c0_i32_0 : i32, i32, i32
  }
  func.func @transform_2(%arg0: i32) -> (i32, i32, i32) {
    %c0_i32 = arith.constant 0 : i32
    %c0_i32_0 = arith.constant 0 : i32
    %c0_i32_1 = arith.constant 0 : i32
    return %arg0, %c0_i32, %c0_i32_0 : i32, i32, i32
  }
  func.func @transform_3(%arg0: i32) -> (i32, i32) {
    %c0_i32 = arith.constant 0 : i32
    %c0_i32_0 = arith.constant 0 : i32
    %c0_i32_1 = arith.constant 0 : i32
    return %c0_i32, %c0_i32_0 : i32, i32
  }
  func.func @transform_4(%arg0: i32) -> (i32, i32) {
    %c0_i32 = arith.constant 0 : i32
    %c0_i32_0 = arith.constant 0 : i32
    %c0_i32_1 = arith.constant 0 : i32
    return %c0_i32, %c0_i32_0 : i32, i32
  }
  func.func @transform_5(%arg0: i32) -> (i32, i32) {
    %c0_i32 = arith.constant 0 : i32
    %c0_i32_0 = arith.constant 0 : i32
    %c0_i32_1 = arith.constant 0 : i32
    return %c0_i32, %c0_i32_0 : i32, i32
  }
  func.func @transform_6(%arg0: i32) -> (i32, i32) {
    %c0_i32 = arith.constant 0 : i32
    %c0_i32_0 = arith.constant 0 : i32
    %c0_i32_1 = arith.constant 0 : i32
    return %c0_i32, %c0_i32_0 : i32, i32
  }
  func.func @transform_7(%arg0: i32) -> (i32, i32) {
    %c0_i32 = arith.constant 0 : i32
    %c0_i32_0 = arith.constant 0 : i32
    %c0_i32_1 = arith.constant 0 : i32
    return %c0_i32, %c0_i32_0 : i32, i32
  }
  func.func @transform_8(%arg0: i32) -> (i32, i32) {
    %c0_i32 = arith.constant 0 : i32
    %c0_i32_0 = arith.constant 0 : i32
    %c0_i32_1 = arith.constant 0 : i32
    return %c0_i32, %c0_i32_0 : i32, i32
  }
  func.func @transform_9(%arg0: i32) -> (i32, i32, i32) {
    %c0_i32 = arith.constant 0 : i32
    %c0_i32_0 = arith.constant 0 : i32
    %c0_i32_1 = arith.constant 0 : i32
    return %arg0, %c0_i32, %c0_i32_0 : i32, i32, i32
  }
}

</mosaic_0001>

<llo_original>
// kernel: tpu_custom_call.1
$region0: #{tpu_custom_call.1}
  #allocation0 [shape = 'u32[]', space=smem, size = 0x4, offset = 0x4, fixed_abs, tag = 'smem constant byte address 0x4 - core index']
  #allocation1 [shape = 'u32[144,128]{1,0:T(1,128)}', space=vmem, size = 0x12000, scoped, tag = 'internal scratch']
  %s0 = inlined_call_operand.vmem [shape: f32[4,8,32], index: 0, kind: input, shape index: {}]
  %s1 = inlined_call_operand.vmem [shape: f32[4,8,32], index: 1, kind: input, shape index: {}]
  %s2 = inlined_call_operand.vmem [shape: f32[4,8,32], index: 2, kind: input, shape index: {}]
  %s3 = inlined_call_operand.vmem [shape: f32[32,16], index: 3, kind: input, shape index: {}]
  %s4 = inlined_call_operand.vmem [shape: f32[32,16], index: 4, kind: input, shape index: {}]
  %s5 = inlined_call_operand.vmem [shape: f32[32,16], index: 5, kind: input, shape index: {}]
  %s6 = inlined_call_operand.vmem [shape: f32[32,16], index: 6, kind: input, shape index: {}]
  %s7 = inlined_call_operand.vmem [shape: f32[32,16], index: 7, kind: input, shape index: {}]
  %s8 = inlined_call_operand.vmem [shape: f32[16,32], index: 8, kind: input, shape index: {}]
  %s9 = inlined_call_operand.hbm [shape: f32[4,8,32], index: 9, kind: output, shape index: {}]
  %s10 = sld [smem:[#allocation0]]
  $region46: #{tpu_custom_call.1} parent=0
    _
  %s12 = ssub.s32 1, %s10
  %s13 = scalar_select 0, %s12, %s10
  $region1: #{tpu_custom_call.1} parent=0
    #allocation2 [shape = 'u8[16384]{0}', space=vmem, size = 0x4000, scoped, tag = 'output window, operand 0, single buffered']
    #allocation3 [shape = 's32[1]{0}', space=sflag, size = 0x4, scoped, tag = 'scoped memory for tpu_custom_call.1']
    %14 = vsyncpa [#allocation3], 0
    // Predicated region
    $region2: #{tpu_custom_call.1} parent=1 // pred_check
      _
    $region3: #{tpu_custom_call.1} parent=1 // pred_check_branch
      %16 = sbr.rel (0) target = $region5
    $region4: #{tpu_custom_call.1} parent=1 // pred_region
      _
    $region5: #{tpu_custom_call.1} parent=1 // pred_fallthru
      _
    // Predicated region
    $region6: #{tpu_custom_call.1} parent=1 // pred_check
      _
    $region7: #{tpu_custom_call.1} parent=1 // pred_check_branch
      %18 = sbr.rel (0) target = $region9
    $region8: #{tpu_custom_call.1} parent=1 // pred_region
      _
    $region9: #{tpu_custom_call.1} parent=1 // pred_fallthru
      _
    // Predicated region
    $region10: #{tpu_custom_call.1} parent=1 // pred_check
      _
    $region11: #{tpu_custom_call.1} parent=1 // pred_check_branch
      %20 = sbr.rel (0) target = $region13
    $region12: #{tpu_custom_call.1} parent=1 // pred_region
      _
    $region13: #{tpu_custom_call.1} parent=1 // pred_fallthru
      _
    // Predicated region
    $region14: #{tpu_custom_call.1} parent=1 // pred_check
      _
    $region15: #{tpu_custom_call.1} parent=1 // pred_check_branch
      %22 = sbr.rel (0) target = $region17
    $region16: #{tpu_custom_call.1} parent=1 // pred_region
      _
    $region17: #{tpu_custom_call.1} parent=1 // pred_fallthru
      _
    // Predicated region
    $region18: #{tpu_custom_call.1} parent=1 // pred_check
      _
    $region19: #{tpu_custom_call.1} parent=1 // pred_check_branch
      %24 = sbr.rel (0) target = $region21
    $region20: #{tpu_custom_call.1} parent=1 // pred_region
      _
    $region21: #{tpu_custom_call.1} parent=1 // pred_fallthru
      _
    // Predicated region
    $region22: #{tpu_custom_call.1} parent=1 // pred_check
      _
    $region23: #{tpu_custom_call.1} parent=1 // pred_check_branch
      %26 = sbr.rel (0) target = $region25
    $region24: #{tpu_custom_call.1} parent=1 // pred_region
      _
    $region25: #{tpu_custom_call.1} parent=1 // pred_fallthru
      _
    // Predicated region
    $region26: #{tpu_custom_call.1} parent=1 // pred_check
      _
    $region27: #{tpu_custom_call.1} parent=1 // pred_check_branch
      %28 = sbr.rel (0) target = $region29
    $region28: #{tpu_custom_call.1} parent=1 // pred_region
      _
    $region29: #{tpu_custom_call.1} parent=1 // pred_fallthru
      _
    // Predicated region
    $region30: #{tpu_custom_call.1} parent=1 // pred_check
      _
    $region31: #{tpu_custom_call.1} parent=1 // pred_check_branch
      %30 = sbr.rel (0) target = $region33
    $region32: #{tpu_custom_call.1} parent=1 // pred_region
      _
    $region33: #{tpu_custom_call.1} parent=1 // pred_fallthru
      _
    // Predicated region
    $region34: #{tpu_custom_call.1} parent=1 // pred_check
      _
    $region35: #{tpu_custom_call.1} parent=1 // pred_check_branch
      %32 = sbr.rel (0) target = $region37
    $region36: #{tpu_custom_call.1} parent=1 // pred_region
      _
    $region37: #{tpu_custom_call.1} parent=1 // pred_fallthru
      _
    %v33 = vld [vmem:[%s0] sm:$0xff]
    %v34 = vld [vmem:[%s0 + $0x8] sm:$0xff]
    %v35 = vld [vmem:[%s0 + $0x10] sm:$0xff]
    %v36 = vld [vmem:[%s0 + $0x18] sm:$0xff]
    %v37 = vld [vmem:[%s1] sm:$0xff]
    %v38 = vld [vmem:[%s1 + $0x8] sm:$0xff]
    %v39 = vld [vmem:[%s1 + $0x10] sm:$0xff]
    %v40 = vld [vmem:[%s1 + $0x18] sm:$0xff]
    %v41 = vld [vmem:[%s2] sm:$0xff]
    %v42 = vld [vmem:[%s2 + $0x8] sm:$0xff]
    %v43 = vld [vmem:[%s2 + $0x10] sm:$0xff]
    %v44 = vld [vmem:[%s2 + $0x18] sm:$0xff]
    %v45 = vld [vmem:[%s3] sm:$0xff]
    %v46 = vld [vmem:[%s3 + $0x8] sm:$0xff]
    %v47 = vld [vmem:[%s3 + $0x10] sm:$0xff]
    %v48 = vld [vmem:[%s3 + $0x18] sm:$0xff]
    %vm49 = vcmask 261120
    %v51 = vsel %vm49, %v33, 0
    %v54 = vsel %vm49, %v34, 0
    %v57 = vsel %vm49, %v35, 0
    %v60 = vsel %vm49, %v36, 0
    %62 = vmatprep.subr.mxu0 0.0
    %63 = vmatpush1.msra.mxu0 %v45
    %64 = vmatprep.subr.mxu0 0.0
    %65 = vmatpush1.msra.mxu0 %v46
    %66 = vmatprep.subr.mxu0 0.0
    %67 = vmatpush1.msra.mxu0 %v47
    %68 = vmatprep.subr.mxu0 0.0
    %69 = vmatpush1.msra.mxu0 %v48
    %70 = vmatprep.subr.mxu0 0.0
    %71 = vmatpush1.msra.mxu0 0.0
    %72 = vmatprep.subr.mxu0 0.0
    %73 = vmatpush1.msra.mxu0 0.0
    %74 = vmatprep.subr.mxu0 0.0
    %75 = vmatpush1.msra.mxu0 0.0
    %76 = vmatprep.subr.mxu0 0.0
    %77 = vmatpush1.msra.mxu0 0.0
    %78 = vmatprep.subr.mxu0 0.0
    %79 = vmatpush1.msra.mxu0 0.0
    %80 = vmatprep.subr.mxu0 0.0
    %81 = vmatpush1.msra.mxu0 0.0
    %82 = vmatprep.subr.mxu0 0.0
    %83 = vmatpush1.msra.mxu0 0.0
    %84 = vmatprep.subr.mxu0 0.0
    %85 = vmatpush1.msra.mxu0 0.0
    %86 = vmatprep.subr.mxu0 0.0
    %87 = vmatpush1.msra.mxu0 0.0
    %88 = vmatprep.subr.mxu0 0.0
    %89 = vmatpush1.msra.mxu0 0.0
    %90 = vmatprep.subr.mxu0 0.0
    %91 = vmatpush1.msra.mxu0 0.0
    %92 = vmatprep.subr.mxu0 0.0
    %93 = vmatpush1.msra.mxu0 0.0
    %94 = vmatprep.subr.mxu0 0.0
    %95 = vmatpush1.msra.mxu0 0.0
    %96 = vmatprep.subr.mxu0 0.0
    %97 = vmatpush1.msra.mxu0 0.0
    %98 = vmatprep.subr.mxu0 0.0
    %99 = vmatpush1.msra.mxu0 0.0
    %100 = vmatprep.subr.mxu0 0.0
    %101 = vmatpush1.msra.mxu0 0.0
    %102 = vmatprep.subr.mxu0 0.0
    %103 = vmatpush1.msra.mxu0 0.0
    %104 = vmatprep.subr.mxu0 0.0
    %105 = vmatpush1.msra.mxu0 0.0
    %106 = vmatprep.subr.mxu0 0.0
    %107 = vmatpush1.msra.mxu0 0.0
    %108 = vmatprep.subr.mxu0 0.0
    %109 = vmatpush1.msra.mxu0 0.0
    %110 = vmatprep.subr.mxu0 0.0
    %111 = vmatpush1.msra.mxu0 0.0
    %112 = vmatprep.subr.mxu0 0.0
    %113 = vmatpush1.msra.mxu0 0.0
    %114 = vmatprep.subr.mxu0 0.0
    %115 = vmatpush1.msra.mxu0 0.0
    %116 = vmatprep.subr.mxu0 0.0
    %117 = vmatpush1.msra.mxu0 0.0
    %118 = vmatprep.subr.mxu0 0.0
    %119 = vmatpush1.msra.mxu0 0.0
    %120 = vmatprep.subr.mxu0 0.0
    %121 = vmatpush1.msra.mxu0 0.0
    %122 = vmatprep.subr.mxu0 0.0
    %123 = vmatpush1.msra.mxu0 0.0
    %124 = vmatprep.subr.mxu0 0.0
    %125 = vmatpush1.msra.mxu0 0.0
    %126 = vmatprep.mubr.f32.mxu0 0.0
    %127 = vmatmul.mubr.f32.gmra.mrb[0].mxu0 %v51
    %v128 = vpop.f32.mrb[0].mxu0
    %v129 = vadd.f32 0.0, %v128
    %v130 = vpop.f32.mrb[0].mxu0
    %131 = vmatprep.mubr.f32.mxu0 0.0
    %132 = vmatmul.mubr.f32.gmra.mrb[0].mxu0 %v54
    %v133 = vpop.f32.mrb[0].mxu0
    %v134 = vadd.f32 0.0, %v133
    %v135 = vpop.f32.mrb[0].mxu0
    %136 = vmatprep.mubr.f32.mxu0 0.0
    %137 = vmatmul.mubr.f32.gmra.mrb[0].mxu0 %v57
    %v138 = vpop.f32.mrb[0].mxu0
    %v139 = vadd.f32 0.0, %v138
    %v140 = vpop.f32.mrb[0].mxu0
    %141 = vmatprep.mubr.f32.mxu0 0.0
    %142 = vmatmul.mubr.f32.gmra.mrb[0].mxu0 %v60
    %v143 = vpop.f32.mrb[0].mxu0
    %v144 = vadd.f32 0.0, %v143
    %v145 = vpop.f32.mrb[0].mxu0
    %146 = vdwg.mxu0
    %v147 = vld [vmem:[%s4] sm:$0xff]
    %v148 = vld [vmem:[%s4 + $0x8] sm:$0xff]
    %v149 = vld [vmem:[%s4 + $0x10] sm:$0xff]
    %v150 = vld [vmem:[%s4 + $0x18] sm:$0xff]
    %v152 = vsel %vm49, %v37, 0
    %v155 = vsel %vm49, %v38, 0
    %v158 = vsel %vm49, %v39, 0
    %v161 = vsel %vm49, %v40, 0
    %163 = vmatprep.subr.mxu0 0.0
    %164 = vmatpush1.msra.mxu0 %v147
    %165 = vmatprep.subr.mxu0 0.0
    %166 = vmatpush1.msra.mxu0 %v148
    %167 = vmatprep.subr.mxu0 0.0
    %168 = vmatpush1.msra.mxu0 %v149
    %169 = vmatprep.subr.mxu0 0.0
    %170 = vmatpush1.msra.mxu0 %v150
    %171 = vmatprep.subr.mxu0 0.0
    %172 = vmatpush1.msra.mxu0 0.0
    %173 = vmatprep.subr.mxu0 0.0
    %174 = vmatpush1.msra.mxu0 0.0
    %175 = vmatprep.subr.mxu0 0.0
    %176 = vmatpush1.msra.mxu0 0.0
    %177 = vmatprep.subr.mxu0 0.0
    %178 = vmatpush1.msra.mxu0 0.0
    %179 = vmatprep.subr.mxu0 0.0
    %180 = vmatpush1.msra.mxu0 0.0
    %181 = vmatprep.subr.mxu0 0.0
    %182 = vmatpush1.msra.mxu0 0.0
    %183 = vmatprep.subr.mxu0 0.0
    %184 = vmatpush1.msra.mxu0 0.0
    %185 = vmatprep.subr.mxu0 0.0
    %186 = vmatpush1.msra.mxu0 0.0
    %187 = vmatprep.subr.mxu0 0.0
    %188 = vmatpush1.msra.mxu0 0.0
    %189 = vmatprep.subr.mxu0 0.0
    %190 = vmatpush1.msra.mxu0 0.0
    %191 = vmatprep.subr.mxu0 0.0
    %192 = vmatpush1.msra.mxu0 0.0
    %193 = vmatprep.subr.mxu0 0.0
    %194 = vmatpush1.msra.mxu0 0.0
    %195 = vmatprep.subr.mxu0 0.0
    %196 = vmatpush1.msra.mxu0 0.0
    %197 = vmatprep.subr.mxu0 0.0
    %198 = vmatpush1.msra.mxu0 0.0
    %199 = vmatprep.subr.mxu0 0.0
    %200 = vmatpush1.msra.mxu0 0.0
    %201 = vmatprep.subr.mxu0 0.0
    %202 = vmatpush1.msra.mxu0 0.0
    %203 = vmatprep.subr.mxu0 0.0
    %204 = vmatpush1.msra.mxu0 0.0
    %205 = vmatprep.subr.mxu0 0.0
    %206 = vmatpush1.msra.mxu0 0.0
    %207 = vmatprep.subr.mxu0 0.0
    %208 = vmatpush1.msra.mxu0 0.0
    %209 = vmatprep.subr.mxu0 0.0
    %210 = vmatpush1.msra.mxu0 0.0
    %211 = vmatprep.subr.mxu0 0.0
    %212 = vmatpush1.msra.mxu0 0.0
    %213 = vmatprep.subr.mxu0 0.0
    %214 = vmatpush1.msra.mxu0 0.0
    %215 = vmatprep.subr.mxu0 0.0
    %216 = vmatpush1.msra.mxu0 0.0
    %217 = vmatprep.subr.mxu0 0.0
    %218 = vmatpush1.msra.mxu0 0.0
    %219 = vmatprep.subr.mxu0 0.0
    %220 = vmatpush1.msra.mxu0 0.0
    %221 = vmatprep.subr.mxu0 0.0
    %222 = vmatpush1.msra.mxu0 0.0
    %223 = vmatprep.subr.mxu0 0.0
    %224 = vmatpush1.msra.mxu0 0.0
    %225 = vmatprep.subr.mxu0 0.0
    %226 = vmatpush1.msra.mxu0 0.0
    %227 = vmatprep.mubr.f32.mxu0 0.0
    %228 = vmatmul.mubr.f32.gmra.mrb[0].mxu0 %v152
    %v229 = vpop.f32.mrb[0].mxu0
    %v230 = vadd.f32 0.0, %v229
    %v231 = vpop.f32.mrb[0].mxu0
    %232 = vmatprep.mubr.f32.mxu0 0.0
    %233 = vmatmul.mubr.f32.gmra.mrb[0].mxu0 %v155
    %v234 = vpop.f32.mrb[0].mxu0
    %v235 = vadd.f32 0.0, %v234
    %v236 = vpop.f32.mrb[0].mxu0
    %237 = vmatprep.mubr.f32.mxu0 0.0
    %238 = vmatmul.mubr.f32.gmra.mrb[0].mxu0 %v158
    %v239 = vpop.f32.mrb[0].mxu0
    %v240 = vadd.f32 0.0, %v239
    %v241 = vpop.f32.mrb[0].mxu0
    %242 = vmatprep.mubr.f32.mxu0 0.0
    %243 = vmatmul.mubr.f32.gmra.mrb[0].mxu0 %v161
    %v244 = vpop.f32.mrb[0].mxu0
    %v245 = vadd.f32 0.0, %v244
    %v246 = vpop.f32.mrb[0].mxu0
    %247 = vdwg.mxu0
    %v248 = vld [vmem:[%s5] sm:$0xff]
    %v249 = vld [vmem:[%s5 + $0x8] sm:$0xff]
    %v250 = vld [vmem:[%s5 + $0x10] sm:$0xff]
    %v251 = vld [vmem:[%s5 + $0x18] sm:$0xff]
    %v253 = vsel %vm49, %v41, 0
    %v256 = vsel %vm49, %v42, 0
    %v259 = vsel %vm49, %v43, 0
    %v262 = vsel %vm49, %v44, 0
    %264 = vmatprep.subr.mxu0 0.0
    %265 = vmatpush1.msra.mxu0 %v248
    %266 = vmatprep.subr.mxu0 0.0
    %267 = vmatpush1.msra.mxu0 %v249
    %268 = vmatprep.subr.mxu0 0.0
    %269 = vmatpush1.msra.mxu0 %v250
    %270 = vmatprep.subr.mxu0 0.0
    %271 = vmatpush1.msra.mxu0 %v251
    %272 = vmatprep.subr.mxu0 0.0
    %273 = vmatpush1.msra.mxu0 0.0
    %274 = vmatprep.subr.mxu0 0.0
    %275 = vmatpush1.msra.mxu0 0.0
    %276 = vmatprep.subr.mxu0 0.0
    %277 = vmatpush1.msra.mxu0 0.0
    %278 = vmatprep.subr.mxu0 0.0
    %279 = vmatpush1.msra.mxu0 0.0
    %280 = vmatprep.subr.mxu0 0.0
    %281 = vmatpush1.msra.mxu0 0.0
    %282 = vmatprep.subr.mxu0 0.0
    %283 = vmatpush1.msra.mxu0 0.0
    %284 = vmatprep.subr.mxu0 0.0
    %285 = vmatpush1.msra.mxu0 0.0
    %286 = vmatprep.subr.mxu0 0.0
    %287 = vmatpush1.msra.mxu0 0.0
    %288 = vmatprep.subr.mxu0 0.0
    %289 = vmatpush1.msra.mxu0 0.0
    %290 = vmatprep.subr.mxu0 0.0
    %291 = vmatpush1.msra.mxu0 0.0
    %292 = vmatprep.subr.mxu0 0.0
    %293 = vmatpush1.msra.mxu0 0.0
    %294 = vmatprep.subr.mxu0 0.0
    %295 = vmatpush1.msra.mxu0 0.0
    %296 = vmatprep.subr.mxu0 0.0
    %297 = vmatpush1.msra.mxu0 0.0
    %298 = vmatprep.subr.mxu0 0.0
    %299 = vmatpush1.msra.mxu0 0.0
    %300 = vmatprep.subr.mxu0 0.0
    %301 = vmatpush1.msra.mxu0 0.0
    %302 = vmatprep.subr.mxu0 0.0
    %303 = vmatpush1.msra.mxu0 0.0
    %304 = vmatprep.subr.mxu0 0.0
    %305 = vmatpush1.msra.mxu0 0.0
    %306 = vmatprep.subr.mxu0 0.0
    %307 = vmatpush1.msra.mxu0 0.0
    %308 = vmatprep.subr.mxu0 0.0
    %309 = vmatpush1.msra.mxu0 0.0
    %310 = vmatprep.subr.mxu0 0.0
    %311 = vmatpush1.msra.mxu0 0.0
    %312 = vmatprep.subr.mxu0 0.0
    %313 = vmatpush1.msra.mxu0 0.0
    %314 = vmatprep.subr.mxu0 0.0
    %315 = vmatpush1.msra.mxu0 0.0
    %316 = vmatprep.subr.mxu0 0.0
    %317 = vmatpush1.msra.mxu0 0.0
    %318 = vmatprep.subr.mxu0 0.0
    %319 = vmatpush1.msra.mxu0 0.0
    %320 = vmatprep.subr.mxu0 0.0
    %321 = vmatpush1.msra.mxu0 0.0
    %322 = vmatprep.subr.mxu0 0.0
    %323 = vmatpush1.msra.mxu0 0.0
    %324 = vmatprep.subr.mxu0 0.0
    %325 = vmatpush1.msra.mxu0 0.0
    %326 = vmatprep.subr.mxu0 0.0
    %327 = vmatpush1.msra.mxu0 0.0
    %328 = vmatprep.mubr.f32.mxu0 0.0
    %329 = vmatmul.mubr.f32.gmra.mrb[0].mxu0 %v253
    %v330 = vpop.f32.mrb[0].mxu0
    %v331 = vadd.f32 0.0, %v330
    %v332 = vpop.f32.mrb[0].mxu0
    %333 = vmatprep.mubr.f32.mxu0 0.0
    %334 = vmatmul.mubr.f32.gmra.mrb[0].mxu0 %v256
    %v335 = vpop.f32.mrb[0].mxu0
    %v336 = vadd.f32 0.0, %v335
    %v337 = vpop.f32.mrb[0].mxu0
    %338 = vmatprep.mubr.f32.mxu0 0.0
    %339 = vmatmul.mubr.f32.gmra.mrb[0].mxu0 %v259
    %v340 = vpop.f32.mrb[0].mxu0
    %v341 = vadd.f32 0.0, %v340
    %v342 = vpop.f32.mrb[0].mxu0
    %343 = vmatprep.mubr.f32.mxu0 0.0
    %344 = vmatmul.mubr.f32.gmra.mrb[0].mxu0 %v262
    %v345 = vpop.f32.mrb[0].mxu0
    %v346 = vadd.f32 0.0, %v345
    %v347 = vpop.f32.mrb[0].mxu0
    %348 = vdwg.mxu0
    %vm349 = vcmask 130048
    %v351 = vsel %vm349, %v129, 0
    %v354 = vsel %vm349, %v230, 0
    %356 = vmatprep.subr.mxu0 0.0
    %357 = vmatpush1.xpose.msra.mxu0 %v354
    %358 = vmatprep.subr.mxu0 0.0
    %359 = vmatpush1.xpose.msra.mxu0 0.0
    %360 = vmatprep.subr.mxu0 0.0
    %361 = vmatpush1.xpose.msra.mxu0 0.0
    %362 = vmatprep.subr.mxu0 0.0
    %363 = vmatpush1.xpose.msra.mxu0 0.0
    %364 = vmatprep.subr.mxu0 0.0
    %365 = vmatpush1.xpose.msra.mxu0 0.0
    %366 = vmatprep.subr.mxu0 0.0
    %367 = vmatpush1.xpose.msra.mxu0 0.0
    %368 = vmatprep.subr.mxu0 0.0
    %369 = vmatpush1.xpose.msra.mxu0 0.0
    %370 = vmatprep.subr.mxu0 0.0
    %371 = vmatpush1.xpose.msra.mxu0 0.0
    %372 = vmatprep.subr.mxu0 0.0
    %373 = vmatpush1.xpose.msra.mxu0 0.0
    %374 = vmatprep.subr.mxu0 0.0
    %375 = vmatpush1.xpose.msra.mxu0 0.0
    %376 = vmatprep.subr.mxu0 0.0
    %377 = vmatpush1.xpose.msra.mxu0 0.0
    %378 = vmatprep.subr.mxu0 0.0
    %379 = vmatpush1.xpose.msra.mxu0 0.0
    %380 = vmatprep.subr.mxu0 0.0
    %381 = vmatpush1.xpose.msra.mxu0 0.0
    %382 = vmatprep.subr.mxu0 0.0
    %383 = vmatpush1.xpose.msra.mxu0 0.0
    %384 = vmatprep.subr.mxu0 0.0
    %385 = vmatpush1.xpose.msra.mxu0 0.0
    %386 = vmatprep.subr.mxu0 0.0
    %387 = vmatpush1.xpose.msra.mxu0 0.0
    %388 = vmatprep.subr.mxu0 0.0
    %389 = vmatpush1.xpose.msra.mxu0 0.0
    %390 = vmatprep.subr.mxu0 0.0
    %391 = vmatpush1.xpose.msra.mxu0 0.0
    %392 = vmatprep.subr.mxu0 0.0
    %393 = vmatpush1.xpose.msra.mxu0 0.0
    %394 = vmatprep.subr.mxu0 0.0
    %395 = vmatpush1.xpose.msra.mxu0 0.0
    %396 = vmatprep.subr.mxu0 0.0
    %397 = vmatpush1.xpose.msra.mxu0 0.0
    %398 = vmatprep.subr.mxu0 0.0
    %399 = vmatpush1.xpose.msra.mxu0 0.0
    %400 = vmatprep.subr.mxu0 0.0
    %401 = vmatpush1.xpose.msra.mxu0 0.0
    %402 = vmatprep.subr.mxu0 0.0
    %403 = vmatpush1.xpose.msra.mxu0 0.0
    %404 = vmatprep.subr.mxu0 0.0
    %405 = vmatpush1.xpose.msra.mxu0 0.0
    %406 = vmatprep.subr.mxu0 0.0
    %407 = vmatpush1.xpose.msra.mxu0 0.0
    %408 = vmatprep.subr.mxu0 0.0
    %409 = vmatpush1.xpose.msra.mxu0 0.0
    %410 = vmatprep.subr.mxu0 0.0
    %411 = vmatpush1.xpose.msra.mxu0 0.0
    %412 = vmatprep.subr.mxu0 0.0
    %413 = vmatpush1.xpose.msra.mxu0 0.0
    %414 = vmatprep.subr.mxu0 0.0
    %415 = vmatpush1.xpose.msra.mxu0 0.0
    %416 = vmatprep.subr.mxu0 0.0
    %417 = vmatpush1.xpose.msra.mxu0 0.0
    %418 = vmatprep.subr.mxu0 0.0
    %419 = vmatpush1.xpose.msra.mxu0 0.0
    %420 = vmatprep.mubr.f32.mxu0 0.0
    %421 = vmatmul.mubr.f32.gmra.mrb[0].mxu0 %v351
    %v422 = vpop.f32.mrb[0].mxu0
    %v423 = vadd.f32 0.0, %v422
    %v424 = vpop.f32.mrb[0].mxu0
    %425 = vdwg.mxu0
    %v427 = vsel %vm349, %v134, 0
    %v430 = vsel %vm349, %v235, 0
    %432 = vmatprep.subr.mxu0 0.0
    %433 = vmatpush1.xpose.msra.mxu0 %v430
    %434 = vmatprep.subr.mxu0 0.0
    %435 = vmatpush1.xpose.msra.mxu0 0.0
    %436 = vmatprep.subr.mxu0 0.0
    %437 = vmatpush1.xpose.msra.mxu0 0.0
    %438 = vmatprep.subr.mxu0 0.0
    %439 = vmatpush1.xpose.msra.mxu0 0.0
    %440 = vmatprep.subr.mxu0 0.0
    %441 = vmatpush1.xpose.msra.mxu0 0.0
    %442 = vmatprep.subr.mxu0 0.0
    %443 = vmatpush1.xpose.msra.mxu0 0.0
    %444 = vmatprep.subr.mxu0 0.0
    %445 = vmatpush1.xpose.msra.mxu0 0.0
    %446 = vmatprep.subr.mxu0 0.0
    %447 = vmatpush1.xpose.msra.mxu0 0.0
    %448 = vmatprep.subr.mxu0 0.0
    %449 = vmatpush1.xpose.msra.mxu0 0.0
    %450 = vmatprep.subr.mxu0 0.0
    %451 = vmatpush1.xpose.msra.mxu0 0.0
    %452 = vmatprep.subr.mxu0 0.0
    %453 = vmatpush1.xpose.msra.mxu0 0.0
    %454 = vmatprep.subr.mxu0 0.0
    %455 = vmatpush1.xpose.msra.mxu0 0.0
    %456 = vmatprep.subr.mxu0 0.0
    %457 = vmatpush1.xpose.msra.mxu0 0.0
    %458 = vmatprep.subr.mxu0 0.0
    %459 = vmatpush1.xpose.msra.mxu0 0.0
    %460 = vmatprep.subr.mxu0 0.0
    %461 = vmatpush1.xpose.msra.mxu0 0.0
    %462 = vmatprep.subr.mxu0 0.0
    %463 = vmatpush1.xpose.msra.mxu0 0.0
    %464 = vmatprep.subr.mxu0 0.0
    %465 = vmatpush1.xpose.msra.mxu0 0.0
    %466 = vmatprep.subr.mxu0 0.0
    %467 = vmatpush1.xpose.msra.mxu0 0.0
    %468 = vmatprep.subr.mxu0 0.0
    %469 = vmatpush1.xpose.msra.mxu0 0.0
    %470 = vmatprep.subr.mxu0 0.0
    %471 = vmatpush1.xpose.msra.mxu0 0.0
    %472 = vmatprep.subr.mxu0 0.0
    %473 = vmatpush1.xpose.msra.mxu0 0.0
    %474 = vmatprep.subr.mxu0 0.0
    %475 = vmatpush1.xpose.msra.mxu0 0.0
    %476 = vmatprep.subr.mxu0 0.0
    %477 = vmatpush1.xpose.msra.mxu0 0.0
    %478 = vmatprep.subr.mxu0 0.0
    %479 = vmatpush1.xpose.msra.mxu0 0.0
    %480 = vmatprep.subr.mxu0 0.0
    %481 = vmatpush1.xpose.msra.mxu0 0.0
    %482 = vmatprep.subr.mxu0 0.0
    %483 = vmatpush1.xpose.msra.mxu0 0.0
    %484 = vmatprep.subr.mxu0 0.0
    %485 = vmatpush1.xpose.msra.mxu0 0.0
    %486 = vmatprep.subr.mxu0 0.0
    %487 = vmatpush1.xpose.msra.mxu0 0.0
    %488 = vmatprep.subr.mxu0 0.0
    %489 = vmatpush1.xpose.msra.mxu0 0.0
    %490 = vmatprep.subr.mxu0 0.0
    %491 = vmatpush1.xpose.msra.mxu0 0.0
    %492 = vmatprep.subr.mxu0 0.0
    %493 = vmatpush1.xpose.msra.mxu0 0.0
    %494 = vmatprep.subr.mxu0 0.0
    %495 = vmatpush1.xpose.msra.mxu0 0.0
    %496 = vmatprep.mubr.f32.mxu0 0.0
    %497 = vmatmul.mubr.f32.gmra.mrb[0].mxu0 %v427
    %v498 = vpop.f32.mrb[0].mxu0
    %v499 = vadd.f32 0.0, %v498
    %v500 = vpop.f32.mrb[0].mxu0
    %501 = vdwg.mxu0
    %v503 = vsel %vm349, %v139, 0
    %v506 = vsel %vm349, %v240, 0
    %508 = vmatprep.subr.mxu0 0.0
    %509 = vmatpush1.xpose.msra.mxu0 %v506
    %510 = vmatprep.subr.mxu0 0.0
    %511 = vmatpush1.xpose.msra.mxu0 0.0
    %512 = vmatprep.subr.mxu0 0.0
    %513 = vmatpush1.xpose.msra.mxu0 0.0
    %514 = vmatprep.subr.mxu0 0.0
    %515 = vmatpush1.xpose.msra.mxu0 0.0
    %516 = vmatprep.subr.mxu0 0.0
    %517 = vmatpush1.xpose.msra.mxu0 0.0
    %518 = vmatprep.subr.mxu0 0.0
    %519 = vmatpush1.xpose.msra.mxu0 0.0
    %520 = vmatprep.subr.mxu0 0.0
    %521 = vmatpush1.xpose.msra.mxu0 0.0
    %522 = vmatprep.subr.mxu0 0.0
    %523 = vmatpush1.xpose.msra.mxu0 0.0
    %524 = vmatprep.subr.mxu0 0.0
    %525 = vmatpush1.xpose.msra.mxu0 0.0
    %526 = vmatprep.subr.mxu0 0.0
    %527 = vmatpush1.xpose.msra.mxu0 0.0
    %528 = vmatprep.subr.mxu0 0.0
    %529 = vmatpush1.xpose.msra.mxu0 0.0
    %530 = vmatprep.subr.mxu0 0.0
    %531 = vmatpush1.xpose.msra.mxu0 0.0
    %532 = vmatprep.subr.mxu0 0.0
    %533 = vmatpush1.xpose.msra.mxu0 0.0
    %534 = vmatprep.subr.mxu0 0.0
    %535 = vmatpush1.xpose.msra.mxu0 0.0
    %536 = vmatprep.subr.mxu0 0.0
    %537 = vmatpush1.xpose.msra.mxu0 0.0
    %538 = vmatprep.subr.mxu0 0.0
    %539 = vmatpush1.xpose.msra.mxu0 0.0
    %540 = vmatprep.subr.mxu0 0.0
    %541 = vmatpush1.xpose.msra.mxu0 0.0
    %542 = vmatprep.subr.mxu0 0.0
    %543 = vmatpush1.xpose.msra.mxu0 0.0
    %544 = vmatprep.subr.mxu0 0.0
    %545 = vmatpush1.xpose.msra.mxu0 0.0
    %546 = vmatprep.subr.mxu0 0.0
    %547 = vmatpush1.xpose.msra.mxu0 0.0
    %548 = vmatprep.subr.mxu0 0.0
    %549 = vmatpush1.xpose.msra.mxu0 0.0
    %550 = vmatprep.subr.mxu0 0.0
    %551 = vmatpush1.xpose.msra.mxu0 0.0
    %552 = vmatprep.subr.mxu0 0.0
    %553 = vmatpush1.xpose.msra.mxu0 0.0
    %554 = vmatprep.subr.mxu0 0.0
    %555 = vmatpush1.xpose.msra.mxu0 0.0
    %556 = vmatprep.subr.mxu0 0.0
    %557 = vmatpush1.xpose.msra.mxu0 0.0
    %558 = vmatprep.subr.mxu0 0.0
    %559 = vmatpush1.xpose.msra.mxu0 0.0
    %560 = vmatprep.subr.mxu0 0.0
    %561 = vmatpush1.xpose.msra.mxu0 0.0
    %562 = vmatprep.subr.mxu0 0.0
    %563 = vmatpush1.xpose.msra.mxu0 0.0
    %564 = vmatprep.subr.mxu0 0.0
    %565 = vmatpush1.xpose.msra.mxu0 0.0
    %566 = vmatprep.subr.mxu0 0.0
    %567 = vmatpush1.xpose.msra.mxu0 0.0
    %568 = vmatprep.subr.mxu0 0.0
    %569 = vmatpush1.xpose.msra.mxu0 0.0
    %570 = vmatprep.subr.mxu0 0.0
    %571 = vmatpush1.xpose.msra.mxu0 0.0
    %572 = vmatprep.mubr.f32.mxu0 0.0
    %573 = vmatmul.mubr.f32.gmra.mrb[0].mxu0 %v503
    %v574 = vpop.f32.mrb[0].mxu0
    %v575 = vadd.f32 0.0, %v574
    %v576 = vpop.f32.mrb[0].mxu0
    %577 = vdwg.mxu0
    %v579 = vsel %vm349, %v144, 0
    %v582 = vsel %vm349, %v245, 0
    %584 = vmatprep.subr.mxu0 0.0
    %585 = vmatpush1.xpose.msra.mxu0 %v582
    %586 = vmatprep.subr.mxu0 0.0
    %587 = vmatpush1.xpose.msra.mxu0 0.0
    %588 = vmatprep.subr.mxu0 0.0
    %589 = vmatpush1.xpose.msra.mxu0 0.0
    %590 = vmatprep.subr.mxu0 0.0
    %591 = vmatpush1.xpose.msra.mxu0 0.0
    %592 = vmatprep.subr.mxu0 0.0
    %593 = vmatpush1.xpose.msra.mxu0 0.0
    %594 = vmatprep.subr.mxu0 0.0
    %595 = vmatpush1.xpose.msra.mxu0 0.0
    %596 = vmatprep.subr.mxu0 0.0
    %597 = vmatpush1.xpose.msra.mxu0 0.0
    %598 = vmatprep.subr.mxu0 0.0
    %599 = vmatpush1.xpose.msra.mxu0 0.0
    %600 = vmatprep.subr.mxu0 0.0
    %601 = vmatpush1.xpose.msra.mxu0 0.0
    %602 = vmatprep.subr.mxu0 0.0
    %603 = vmatpush1.xpose.msra.mxu0 0.0
    %604 = vmatprep.subr.mxu0 0.0
    %605 = vmatpush1.xpose.msra.mxu0 0.0
    %606 = vmatprep.subr.mxu0 0.0
    %607 = vmatpush1.xpose.msra.mxu0 0.0
    %608 = vmatprep.subr.mxu0 0.0
    %609 = vmatpush1.xpose.msra.mxu0 0.0
    %610 = vmatprep.subr.mxu0 0.0
    %611 = vmatpush1.xpose.msra.mxu0 0.0
    %612 = vmatprep.subr.mxu0 0.0
    %613 = vmatpush1.xpose.msra.mxu0 0.0
    %614 = vmatprep.subr.mxu0 0.0
    %615 = vmatpush1.xpose.msra.mxu0 0.0
    %616 = vmatprep.subr.mxu0 0.0
    %617 = vmatpush1.xpose.msra.mxu0 0.0
    %618 = vmatprep.subr.mxu0 0.0
    %619 = vmatpush1.xpose.msra.mxu0 0.0
    %620 = vmatprep.subr.mxu0 0.0
    %621 = vmatpush1.xpose.msra.mxu0 0.0
    %622 = vmatprep.subr.mxu0 0.0
    %623 = vmatpush1.xpose.msra.mxu0 0.0
    %624 = vmatprep.subr.mxu0 0.0
    %625 = vmatpush1.xpose.msra.mxu0 0.0
    %626 = vmatprep.subr.mxu0 0.0
    %627 = vmatpush1.xpose.msra.mxu0 0.0
    %628 = vmatprep.subr.mxu0 0.0
    %629 = vmatpush1.xpose.msra.mxu0 0.0
    %630 = vmatprep.subr.mxu0 0.0
    %631 = vmatpush1.xpose.msra.mxu0 0.0
    %632 = vmatprep.subr.mxu0 0.0
    %633 = vmatpush1.xpose.msra.mxu0 0.0
    %634 = vmatprep.subr.mxu0 0.0
    %635 = vmatpush1.xpose.msra.mxu0 0.0
    %636 = vmatprep.subr.mxu0 0.0
    %637 = vmatpush1.xpose.msra.mxu0 0.0
    %638 = vmatprep.subr.mxu0 0.0
    %639 = vmatpush1.xpose.msra.mxu0 0.0
    %640 = vmatprep.subr.mxu0 0.0
    %641 = vmatpush1.xpose.msra.mxu0 0.0
    %642 = vmatprep.subr.mxu0 0.0
    %643 = vmatpush1.xpose.msra.mxu0 0.0
    %644 = vmatprep.subr.mxu0 0.0
    %645 = vmatpush1.xpose.msra.mxu0 0.0
    %646 = vmatprep.subr.mxu0 0.0
    %647 = vmatpush1.xpose.msra.mxu0 0.0
    %648 = vmatprep.mubr.f32.mxu0 0.0
    %649 = vmatmul.mubr.f32.gmra.mrb[0].mxu0 %v579
    %v650 = vpop.f32.mrb[0].mxu0
    %v651 = vadd.f32 0.0, %v650
    %v652 = vpop.f32.mrb[0].mxu0
    %653 = vdwg.mxu0
    %v655 = vsel %vm349, %v331, 0
    %657 = vmatprep.subr.mxu0 0.0
    %658 = vmatpush1.xpose.msra.mxu0 %v655
    %659 = vmatprep.subr.mxu0 0.0
    %660 = vmatpush1.xpose.msra.mxu0 0.0
    %661 = vmatprep.subr.mxu0 0.0
    %662 = vmatpush1.xpose.msra.mxu0 0.0
    %663 = vmatprep.subr.mxu0 0.0
    %664 = vmatpush1.xpose.msra.mxu0 0.0
    %665 = vmatprep.subr.mxu0 0.0
    %666 = vmatpush1.xpose.msra.mxu0 0.0
    %667 = vmatprep.subr.mxu0 0.0
    %668 = vmatpush1.xpose.msra.mxu0 0.0
    %669 = vmatprep.subr.mxu0 0.0
    %670 = vmatpush1.xpose.msra.mxu0 0.0
    %671 = vmatprep.subr.mxu0 0.0
    %672 = vmatpush1.xpose.msra.mxu0 0.0
    %673 = vmatprep.subr.mxu0 0.0
    %674 = vmatpush1.xpose.msra.mxu0 0.0
    %675 = vmatprep.subr.mxu0 0.0
    %676 = vmatpush1.xpose.msra.mxu0 0.0
    %677 = vmatprep.subr.mxu0 0.0
    %678 = vmatpush1.xpose.msra.mxu0 0.0
    %679 = vmatprep.subr.mxu0 0.0
    %680 = vmatpush1.xpose.msra.mxu0 0.0
    %681 = vmatprep.subr.mxu0 0.0
    %682 = vmatpush1.xpose.msra.mxu0 0.0
    %683 = vmatprep.subr.mxu0 0.0
    %684 = vmatpush1.xpose.msra.mxu0 0.0
    %685 = vmatprep.subr.mxu0 0.0
    %686 = vmatpush1.xpose.msra.mxu0 0.0
    %687 = vmatprep.subr.mxu0 0.0
    %688 = vmatpush1.xpose.msra.mxu0 0.0
    %689 = vmatprep.subr.mxu0 0.0
    %690 = vmatpush1.xpose.msra.mxu0 0.0
    %691 = vmatprep.subr.mxu0 0.0
    %692 = vmatpush1.xpose.msra.mxu0 0.0
    %693 = vmatprep.subr.mxu0 0.0
    %694 = vmatpush1.xpose.msra.mxu0 0.0
    %695 = vmatprep.subr.mxu0 0.0
    %696 = vmatpush1.xpose.msra.mxu0 0.0
    %697 = vmatprep.subr.mxu0 0.0
    %698 = vmatpush1.xpose.msra.mxu0 0.0
    %699 = vmatprep.subr.mxu0 0.0
    %700 = vmatpush1.xpose.msra.mxu0 0.0
    %701 = vmatprep.subr.mxu0 0.0
    %702 = vmatpush1.xpose.msra.mxu0 0.0
    %703 = vmatprep.subr.mxu0 0.0
    %704 = vmatpush1.xpose.msra.mxu0 0.0
    %705 = vmatprep.subr.mxu0 0.0
    %706 = vmatpush1.xpose.msra.mxu0 0.0
    %707 = vmatprep.subr.mxu0 0.0
    %708 = vmatpush1.xpose.msra.mxu0 0.0
    %709 = vmatprep.subr.mxu0 0.0
    %710 = vmatpush1.xpose.msra.mxu0 0.0
    %711 = vmatprep.subr.mxu0 0.0
    %712 = vmatpush1.xpose.msra.mxu0 0.0
    %713 = vmatprep.subr.mxu0 0.0
    %714 = vmatpush1.xpose.msra.mxu0 0.0
    %715 = vmatprep.subr.mxu0 0.0
    %716 = vmatpush1.xpose.msra.mxu0 0.0
    %717 = vmatprep.subr.mxu0 0.0
    %718 = vmatpush1.xpose.msra.mxu0 0.0
    %719 = vmatprep.subr.mxu0 0.0
    %720 = vmatpush1.xpose.msra.mxu0 0.0
    %721 = vmatprep.mubr.f32.mxu0 0.0
    %722 = vmatmul.mubr.f32.gmra.mrb[0].mxu0 %v351
    %v723 = vpop.f32.mrb[0].mxu0
    %v724 = vadd.f32 0.0, %v723
    %v725 = vpop.f32.mrb[0].mxu0
    %726 = vdwg.mxu0
    %v728 = vsel %vm349, %v336, 0
    %730 = vmatprep.subr.mxu0 0.0
    %731 = vmatpush1.xpose.msra.mxu0 %v728
    %732 = vmatprep.subr.mxu0 0.0
    %733 = vmatpush1.xpose.msra.mxu0 0.0
    %734 = vmatprep.subr.mxu0 0.0
    %735 = vmatpush1.xpose.msra.mxu0 0.0
    %736 = vmatprep.subr.mxu0 0.0
    %737 = vmatpush1.xpose.msra.mxu0 0.0
    %738 = vmatprep.subr.mxu0 0.0
    %739 = vmatpush1.xpose.msra.mxu0 0.0
    %740 = vmatprep.subr.mxu0 0.0
    %741 = vmatpush1.xpose.msra.mxu0 0.0
    %742 = vmatprep.subr.mxu0 0.0
    %743 = vmatpush1.xpose.msra.mxu0 0.0
    %744 = vmatprep.subr.mxu0 0.0
    %745 = vmatpush1.xpose.msra.mxu0 0.0
    %746 = vmatprep.subr.mxu0 0.0
    %747 = vmatpush1.xpose.msra.mxu0 0.0
    %748 = vmatprep.subr.mxu0 0.0
    %749 = vmatpush1.xpose.msra.mxu0 0.0
    %750 = vmatprep.subr.mxu0 0.0
    %751 = vmatpush1.xpose.msra.mxu0 0.0
    %752 = vmatprep.subr.mxu0 0.0
    %753 = vmatpush1.xpose.msra.mxu0 0.0
    %754 = vmatprep.subr.mxu0 0.0
    %755 = vmatpush1.xpose.msra.mxu0 0.0
    %756 = vmatprep.subr.mxu0 0.0
    %757 = vmatpush1.xpose.msra.mxu0 0.0
    %758 = vmatprep.subr.mxu0 0.0
    %759 = vmatpush1.xpose.msra.mxu0 0.0
    %760 = vmatprep.subr.mxu0 0.0
    %761 = vmatpush1.xpose.msra.mxu0 0.0
    %762 = vmatprep.subr.mxu0 0.0
    %763 = vmatpush1.xpose.msra.mxu0 0.0
    %764 = vmatprep.subr.mxu0 0.0
    %765 = vmatpush1.xpose.msra.mxu0 0.0
    %766 = vmatprep.subr.mxu0 0.0
    %767 = vmatpush1.xpose.msra.mxu0 0.0
    %768 = vmatprep.subr.mxu0 0.0
    %769 = vmatpush1.xpose.msra.mxu0 0.0
    %770 = vmatprep.subr.mxu0 0.0
    %771 = vmatpush1.xpose.msra.mxu0 0.0
    %772 = vmatprep.subr.mxu0 0.0
    %773 = vmatpush1.xpose.msra.mxu0 0.0
    %774 = vmatprep.subr.mxu0 0.0
    %775 = vmatpush1.xpose.msra.mxu0 0.0
    %776 = vmatprep.subr.mxu0 0.0
    %777 = vmatpush1.xpose.msra.mxu0 0.0
    %778 = vmatprep.subr.mxu0 0.0
    %779 = vmatpush1.xpose.msra.mxu0 0.0
    %780 = vmatprep.subr.mxu0 0.0
    %781 = vmatpush1.xpose.msra.mxu0 0.0
    %782 = vmatprep.subr.mxu0 0.0
    %783 = vmatpush1.xpose.msra.mxu0 0.0
    %784 = vmatprep.subr.mxu0 0.0
    %785 = vmatpush1.xpose.msra.mxu0 0.0
    %786 = vmatprep.subr.mxu0 0.0
    %787 = vmatpush1.xpose.msra.mxu0 0.0
    %788 = vmatprep.subr.mxu0 0.0
    %789 = vmatpush1.xpose.msra.mxu0 0.0
    %790 = vmatprep.subr.mxu0 0.0
    %791 = vmatpush1.xpose.msra.mxu0 0.0
    %792 = vmatprep.subr.mxu0 0.0
    %793 = vmatpush1.xpose.msra.mxu0 0.0
    %794 = vmatprep.mubr.f32.mxu0 0.0
    %795 = vmatmul.mubr.f32.gmra.mrb[0].mxu0 %v427
    %v796 = vpop.f32.mrb[0].mxu0
    %v797 = vadd.f32 0.0, %v796
    %v798 = vpop.f32.mrb[0].mxu0
    %799 = vdwg.mxu0
    %v801 = vsel %vm349, %v341, 0
    %803 = vmatprep.subr.mxu0 0.0
    %804 = vmatpush1.xpose.msra.mxu0 %v801
    %805 = vmatprep.subr.mxu0 0.0
    %806 = vmatpush1.xpose.msra.mxu0 0.0
    %807 = vmatprep.subr.mxu0 0.0
    %808 = vmatpush1.xpose.msra.mxu0 0.0
    %809 = vmatprep.subr.mxu0 0.0
    %810 = vmatpush1.xpose.msra.mxu0 0.0
    %811 = vmatprep.subr.mxu0 0.0
    %812 = vmatpush1.xpose.msra.mxu0 0.0
    %813 = vmatprep.subr.mxu0 0.0
    %814 = vmatpush1.xpose.msra.mxu0 0.0
    %815 = vmatprep.subr.mxu0 0.0
    %816 = vmatpush1.xpose.msra.mxu0 0.0
    %817 = vmatprep.subr.mxu0 0.0
    %818 = vmatpush1.xpose.msra.mxu0 0.0
    %819 = vmatprep.subr.mxu0 0.0
    %820 = vmatpush1.xpose.msra.mxu0 0.0
    %821 = vmatprep.subr.mxu0 0.0
    %822 = vmatpush1.xpose.msra.mxu0 0.0
    %823 = vmatprep.subr.mxu0 0.0
    %824 = vmatpush1.xpose.msra.mxu0 0.0
    %825 = vmatprep.subr.mxu0 0.0
    %826 = vmatpush1.xpose.msra.mxu0 0.0
    %827 = vmatprep.subr.mxu0 0.0
    %828 = vmatpush1.xpose.msra.mxu0 0.0
    %829 = vmatprep.subr.mxu0 0.0
    %830 = vmatpush1.xpose.msra.mxu0 0.0
    %831 = vmatprep.subr.mxu0 0.0
    %832 = vmatpush1.xpose.msra.mxu0 0.0
    %833 = vmatprep.subr.mxu0 0.0
    %834 = vmatpush1.xpose.msra.mxu0 0.0
    %835 = vmatprep.subr.mxu0 0.0
    %836 = vmatpush1.xpose.msra.mxu0 0.0
    %837 = vmatprep.subr.mxu0 0.0
    %838 = vmatpush1.xpose.msra.mxu0 0.0
    %839 = vmatprep.subr.mxu0 0.0
    %840 = vmatpush1.xpose.msra.mxu0 0.0
    %841 = vmatprep.subr.mxu0 0.0
    %842 = vmatpush1.xpose.msra.mxu0 0.0
    %843 = vmatprep.subr.mxu0 0.0
    %844 = vmatpush1.xpose.msra.mxu0 0.0
    %845 = vmatprep.subr.mxu0 0.0
    %846 = vmatpush1.xpose.msra.mxu0 0.0
    %847 = vmatprep.subr.mxu0 0.0
    %848 = vmatpush1.xpose.msra.mxu0 0.0
    %849 = vmatprep.subr.mxu0 0.0
    %850 = vmatpush1.xpose.msra.mxu0 0.0
    %851 = vmatprep.subr.mxu0 0.0
    %852 = vmatpush1.xpose.msra.mxu0 0.0
    %853 = vmatprep.subr.mxu0 0.0
    %854 = vmatpush1.xpose.msra.mxu0 0.0
    %855 = vmatprep.subr.mxu0 0.0
    %856 = vmatpush1.xpose.msra.mxu0 0.0
    %857 = vmatprep.subr.mxu0 0.0
    %858 = vmatpush1.xpose.msra.mxu0 0.0
    %859 = vmatprep.subr.mxu0 0.0
    %860 = vmatpush1.xpose.msra.mxu0 0.0
    %861 = vmatprep.subr.mxu0 0.0
    %862 = vmatpush1.xpose.msra.mxu0 0.0
    %863 = vmatprep.subr.mxu0 0.0
    %864 = vmatpush1.xpose.msra.mxu0 0.0
    %865 = vmatprep.subr.mxu0 0.0
    %866 = vmatpush1.xpose.msra.mxu0 0.0
    %867 = vmatprep.mubr.f32.mxu0 0.0
    %868 = vmatmul.mubr.f32.gmra.mrb[0].mxu0 %v503
    %v869 = vpop.f32.mrb[0].mxu0
    %v870 = vadd.f32 0.0, %v869
    %v871 = vpop.f32.mrb[0].mxu0
    %872 = vdwg.mxu0
    %v874 = vsel %vm349, %v346, 0
    %876 = vmatprep.subr.mxu0 0.0
    %877 = vmatpush1.xpose.msra.mxu0 %v874
    %878 = vmatprep.subr.mxu0 0.0
    %879 = vmatpush1.xpose.msra.mxu0 0.0
    %880 = vmatprep.subr.mxu0 0.0
    %881 = vmatpush1.xpose.msra.mxu0 0.0
    %882 = vmatprep.subr.mxu0 0.0
    %883 = vmatpush1.xpose.msra.mxu0 0.0
    %884 = vmatprep.subr.mxu0 0.0
    %885 = vmatpush1.xpose.msra.mxu0 0.0
    %886 = vmatprep.subr.mxu0 0.0
    %887 = vmatpush1.xpose.msra.mxu0 0.0
    %888 = vmatprep.subr.mxu0 0.0
    %889 = vmatpush1.xpose.msra.mxu0 0.0
    %890 = vmatprep.subr.mxu0 0.0
    %891 = vmatpush1.xpose.msra.mxu0 0.0
    %892 = vmatprep.subr.mxu0 0.0
    %893 = vmatpush1.xpose.msra.mxu0 0.0
    %894 = vmatprep.subr.mxu0 0.0
    %895 = vmatpush1.xpose.msra.mxu0 0.0
    %896 = vmatprep.subr.mxu0 0.0
    %897 = vmatpush1.xpose.msra.mxu0 0.0
    %898 = vmatprep.subr.mxu0 0.0
    %899 = vmatpush1.xpose.msra.mxu0 0.0
    %900 = vmatprep.subr.mxu0 0.0
    %901 = vmatpush1.xpose.msra.mxu0 0.0
    %902 = vmatprep.subr.mxu0 0.0
    %903 = vmatpush1.xpose.msra.mxu0 0.0
    %904 = vmatprep.subr.mxu0 0.0
    %905 = vmatpush1.xpose.msra.mxu0 0.0
    %906 = vmatprep.subr.mxu0 0.0
    %907 = vmatpush1.xpose.msra.mxu0 0.0
    %908 = vmatprep.subr.mxu0 0.0
    %909 = vmatpush1.xpose.msra.mxu0 0.0
    %910 = vmatprep.subr.mxu0 0.0
    %911 = vmatpush1.xpose.msra.mxu0 0.0
    %912 = vmatprep.subr.mxu0 0.0
    %913 = vmatpush1.xpose.msra.mxu0 0.0
    %914 = vmatprep.subr.mxu0 0.0
    %915 = vmatpush1.xpose.msra.mxu0 0.0
    %916 = vmatprep.subr.mxu0 0.0
    %917 = vmatpush1.xpose.msra.mxu0 0.0
    %918 = vmatprep.subr.mxu0 0.0
    %919 = vmatpush1.xpose.msra.mxu0 0.0
    %920 = vmatprep.subr.mxu0 0.0
    %921 = vmatpush1.xpose.msra.mxu0 0.0
    %922 = vmatprep.subr.mxu0 0.0
    %923 = vmatpush1.xpose.msra.mxu0 0.0
    %924 = vmatprep.subr.mxu0 0.0
    %925 = vmatpush1.xpose.msra.mxu0 0.0
    %926 = vmatprep.subr.mxu0 0.0
    %927 = vmatpush1.xpose.msra.mxu0 0.0
    %928 = vmatprep.subr.mxu0 0.0
    %929 = vmatpush1.xpose.msra.mxu0 0.0
    %930 = vmatprep.subr.mxu0 0.0
    %931 = vmatpush1.xpose.msra.mxu0 0.0
    %932 = vmatprep.subr.mxu0 0.0
    %933 = vmatpush1.xpose.msra.mxu0 0.0
    %934 = vmatprep.subr.mxu0 0.0
    %935 = vmatpush1.xpose.msra.mxu0 0.0
    %936 = vmatprep.subr.mxu0 0.0
    %937 = vmatpush1.xpose.msra.mxu0 0.0
    %938 = vmatprep.subr.mxu0 0.0
    %939 = vmatpush1.xpose.msra.mxu0 0.0
    %940 = vmatprep.mubr.f32.mxu0 0.0
    %941 = vmatmul.mubr.f32.gmra.mrb[0].mxu0 %v579
    %v942 = vpop.f32.mrb[0].mxu0
    %v943 = vadd.f32 0.0, %v942
    %v944 = vpop.f32.mrb[0].mxu0
    %945 = vdwg.mxu0
    %vm946 = vcmask 64512
    %v947 = vsel %vm946, %v423, -inf
    %948 = vmax.xlane.f32.xlu0 %v947
    %v949 = vpop.xlane.xlu0 %948
    %v950 = vsel %vm946, %v499, -inf
    %951 = vmax.xlane.f32.xlu0 %v950
    %v952 = vpop.xlane.xlu0 %951
    %v953 = vsel %vm946, %v575, -inf
    %954 = vmax.xlane.f32.xlu0 %v953
    %v955 = vpop.xlane.xlu0 %954
    %v956 = vsel %vm946, %v651, -inf
    %957 = vmax.xlane.f32.xlu0 %v956
    %v958 = vpop.xlane.xlu0 %957
    %v959 = vsel %vm946, %v724, -inf
    %960 = vmax.xlane.f32.xlu0 %v959
    %v961 = vpop.xlane.xlu0 %960
    %v962 = vsel %vm946, %v797, -inf
    %963 = vmax.xlane.f32.xlu0 %v962
    %v964 = vpop.xlane.xlu0 %963
    %v965 = vsel %vm946, %v870, -inf
    %966 = vmax.xlane.f32.xlu0 %v965
    %v967 = vpop.xlane.xlu0 %966
    %v968 = vsel %vm946, %v943, -inf
    %969 = vmax.xlane.f32.xlu0 %v968
    %v970 = vpop.xlane.xlu0 %969
    %v971 = vsub.f32 %v423, %v949
    %v972 = vsub.f32 %v499, %v952
    %v973 = vsub.f32 %v575, %v955
    %v974 = vsub.f32 %v651, %v958
    %v975 = vsub.f32 %v724, %v961
    %v976 = vsub.f32 %v797, %v964
    %v977 = vsub.f32 %v870, %v967
    %v978 = vsub.f32 %v943, %v970
    %v979 = vmul.f32 %v971, 1.442695
    %v980 = vpow.pop %v979
    %v981 = vmul.f32 %v972, 1.442695
    %v982 = vpow.pop %v981
    %v983 = vmul.f32 %v973, 1.442695
    %v984 = vpow.pop %v983
    %v985 = vmul.f32 %v974, 1.442695
    %v986 = vpow.pop %v985
    %v987 = vmul.f32 %v975, 1.442695
    %v988 = vpow.pop %v987
    %v989 = vmul.f32 %v976, 1.442695
    %v990 = vpow.pop %v989
    %v991 = vmul.f32 %v977, 1.442695
    %v992 = vpow.pop %v991
    %v993 = vmul.f32 %v978, 1.442695
    %v994 = vpow.pop %v993
    %v995 = vsel %vm946, %v980, 0.0
    %996 = vadd.xlane.f32.xlu0 %v995
    %v997 = vpop.xlane.xlu0 %996
    %v998 = vsel %vm946, %v982, 0.0
    %999 = vadd.xlane.f32.xlu0 %v998
    %v1000 = vpop.xlane.xlu0 %999
    %v1001 = vsel %vm946, %v984, 0.0
    %1002 = vadd.xlane.f32.xlu0 %v1001
    %v1003 = vpop.xlane.xlu0 %1002
    %v1004 = vsel %vm946, %v986, 0.0
    %1005 = vadd.xlane.f32.xlu0 %v1004
    %v1006 = vpop.xlane.xlu0 %1005
    %v1007 = vsel %vm946, %v988, 0.0
    %1008 = vadd.xlane.f32.xlu0 %v1007
    %v1009 = vpop.xlane.xlu0 %1008
    %v1010 = vsel %vm946, %v990, 0.0
    %1011 = vadd.xlane.f32.xlu0 %v1010
    %v1012 = vpop.xlane.xlu0 %1011
    %v1013 = vsel %vm946, %v992, 0.0
    %1014 = vadd.xlane.f32.xlu0 %v1013
    %v1015 = vpop.xlane.xlu0 %1014
    %v1016 = vsel %vm946, %v994, 0.0
    %1017 = vadd.xlane.f32.xlu0 %v1016
    %v1018 = vpop.xlane.xlu0 %1017
    %v1019 = vrcp.pop %v997
    %v1020 = vrcp.pop %v1000
    %v1021 = vrcp.pop %v1003
    %v1022 = vrcp.pop %v1006
    %v1023 = vrcp.pop %v1009
    %v1024 = vrcp.pop %v1012
    %v1025 = vrcp.pop %v1015
    %v1026 = vrcp.pop %v1018
    %v1027 = vmul.f32 %v980, %v1019
    %v1028 = vmul.f32 %v982, %v1020
    %v1029 = vmul.f32 %v984, %v1021
    %v1030 = vmul.f32 %v986, %v1022
    %v1031 = vmul.f32 %v988, %v1023
    %v1032 = vmul.f32 %v990, %v1024
    %v1033 = vmul.f32 %v992, %v1025
    %v1034 = vmul.f32 %v994, %v1026
    %v1036 = vsel %vm946, %v1027, 0
    %1038 = vmatprep.subr.mxu0 0.0
    %1039 = vmatpush1.msra.mxu0 %v37
    %1040 = vmatprep.subr.mxu0 0.0
    %1041 = vmatpush1.msra.mxu0 0.0
    %1042 = vmatprep.subr.mxu0 0.0
    %1043 = vmatpush1.msra.mxu0 0.0
    %1044 = vmatprep.subr.mxu0 0.0
    %1045 = vmatpush1.msra.mxu0 0.0
    %1046 = vmatprep.subr.mxu0 0.0
    %1047 = vmatpush1.msra.mxu0 0.0
    %1048 = vmatprep.subr.mxu0 0.0
    %1049 = vmatpush1.msra.mxu0 0.0
    %1050 = vmatprep.subr.mxu0 0.0
    %1051 = vmatpush1.msra.mxu0 0.0
    %1052 = vmatprep.subr.mxu0 0.0
    %1053 = vmatpush1.msra.mxu0 0.0
    %1054 = vmatprep.subr.mxu0 0.0
    %1055 = vmatpush1.msra.mxu0 0.0
    %1056 = vmatprep.subr.mxu0 0.0
    %1057 = vmatpush1.msra.mxu0 0.0
    %1058 = vmatprep.subr.mxu0 0.0
    %1059 = vmatpush1.msra.mxu0 0.0
    %1060 = vmatprep.subr.mxu0 0.0
    %1061 = vmatpush1.msra.mxu0 0.0
    %1062 = vmatprep.subr.mxu0 0.0
    %1063 = vmatpush1.msra.mxu0 0.0
    %1064 = vmatprep.subr.mxu0 0.0
    %1065 = vmatpush1.msra.mxu0 0.0
    %1066 = vmatprep.subr.mxu0 0.0
    %1067 = vmatpush1.msra.mxu0 0.0
    %1068 = vmatprep.subr.mxu0 0.0
    %1069 = vmatpush1.msra.mxu0 0.0
    %1070 = vmatprep.subr.mxu0 0.0
    %1071 = vmatpush1.msra.mxu0 0.0
    %1072 = vmatprep.subr.mxu0 0.0
    %1073 = vmatpush1.msra.mxu0 0.0
    %1074 = vmatprep.subr.mxu0 0.0
    %1075 = vmatpush1.msra.mxu0 0.0
    %1076 = vmatprep.subr.mxu0 0.0
    %1077 = vmatpush1.msra.mxu0 0.0
    %1078 = vmatprep.subr.mxu0 0.0
    %1079 = vmatpush1.msra.mxu0 0.0
    %1080 = vmatprep.subr.mxu0 0.0
    %1081 = vmatpush1.msra.mxu0 0.0
    %1082 = vmatprep.subr.mxu0 0.0
    %1083 = vmatpush1.msra.mxu0 0.0
    %1084 = vmatprep.subr.mxu0 0.0
    %1085 = vmatpush1.msra.mxu0 0.0
    %1086 = vmatprep.subr.mxu0 0.0
    %1087 = vmatpush1.msra.mxu0 0.0
    %1088 = vmatprep.subr.mxu0 0.0
    %1089 = vmatpush1.msra.mxu0 0.0
    %1090 = vmatprep.subr.mxu0 0.0
    %1091 = vmatpush1.msra.mxu0 0.0
    %1092 = vmatprep.subr.mxu0 0.0
    %1093 = vmatpush1.msra.mxu0 0.0
    %1094 = vmatprep.subr.mxu0 0.0
    %1095 = vmatpush1.msra.mxu0 0.0
    %1096 = vmatprep.subr.mxu0 0.0
    %1097 = vmatpush1.msra.mxu0 0.0
    %1098 = vmatprep.subr.mxu0 0.0
    %1099 = vmatpush1.msra.mxu0 0.0
    %1100 = vmatprep.subr.mxu0 0.0
    %1101 = vmatpush1.msra.mxu0 0.0
    %1102 = vmatprep.mubr.f32.mxu0 0.0
    %1103 = vmatmul.mubr.f32.gmra.mrb[0].mxu0 %v1036
    %v1104 = vpop.f32.mrb[0].mxu0
    %v1105 = vadd.f32 0.0, %v1104
    %v1106 = vpop.f32.mrb[0].mxu0
    %1107 = vdwg.mxu0
    %v1109 = vsel %vm946, %v1028, 0
    %1111 = vmatprep.subr.mxu0 0.0
    %1112 = vmatpush1.msra.mxu0 %v38
    %1113 = vmatprep.subr.mxu0 0.0
    %1114 = vmatpush1.msra.mxu0 0.0
    %1115 = vmatprep.subr.mxu0 0.0
    %1116 = vmatpush1.msra.mxu0 0.0
    %1117 = vmatprep.subr.mxu0 0.0
    %1118 = vmatpush1.msra.mxu0 0.0
    %1119 = vmatprep.subr.mxu0 0.0
    %1120 = vmatpush1.msra.mxu0 0.0
    %1121 = vmatprep.subr.mxu0 0.0
    %1122 = vmatpush1.msra.mxu0 0.0
    %1123 = vmatprep.subr.mxu0 0.0
    %1124 = vmatpush1.msra.mxu0 0.0
    %1125 = vmatprep.subr.mxu0 0.0
    %1126 = vmatpush1.msra.mxu0 0.0
    %1127 = vmatprep.subr.mxu0 0.0
    %1128 = vmatpush1.msra.mxu0 0.0
    %1129 = vmatprep.subr.mxu0 0.0
    %1130 = vmatpush1.msra.mxu0 0.0
    %1131 = vmatprep.subr.mxu0 0.0
    %1132 = vmatpush1.msra.mxu0 0.0
    %1133 = vmatprep.subr.mxu0 0.0
    %1134 = vmatpush1.msra.mxu0 0.0
    %1135 = vmatprep.subr.mxu0 0.0
    %1136 = vmatpush1.msra.mxu0 0.0
    %1137 = vmatprep.subr.mxu0 0.0
    %1138 = vmatpush1.msra.mxu0 0.0
    %1139 = vmatprep.subr.mxu0 0.0
    %1140 = vmatpush1.msra.mxu0 0.0
    %1141 = vmatprep.subr.mxu0 0.0
    %1142 = vmatpush1.msra.mxu0 0.0
    %1143 = vmatprep.subr.mxu0 0.0
    %1144 = vmatpush1.msra.mxu0 0.0
    %1145 = vmatprep.subr.mxu0 0.0
    %1146 = vmatpush1.msra.mxu0 0.0
    %1147 = vmatprep.subr.mxu0 0.0
    %1148 = vmatpush1.msra.mxu0 0.0
    %1149 = vmatprep.subr.mxu0 0.0
    %1150 = vmatpush1.msra.mxu0 0.0
    %1151 = vmatprep.subr.mxu0 0.0
    %1152 = vmatpush1.msra.mxu0 0.0
    %1153 = vmatprep.subr.mxu0 0.0
    %1154 = vmatpush1.msra.mxu0 0.0
    %1155 = vmatprep.subr.mxu0 0.0
    %1156 = vmatpush1.msra.mxu0 0.0
    %1157 = vmatprep.subr.mxu0 0.0
    %1158 = vmatpush1.msra.mxu0 0.0
    %1159 = vmatprep.subr.mxu0 0.0
    %1160 = vmatpush1.msra.mxu0 0.0
    %1161 = vmatprep.subr.mxu0 0.0
    %1162 = vmatpush1.msra.mxu0 0.0
    %1163 = vmatprep.subr.mxu0 0.0
    %1164 = vmatpush1.msra.mxu0 0.0
    %1165 = vmatprep.subr.mxu0 0.0
    %1166 = vmatpush1.msra.mxu0 0.0
    %1167 = vmatprep.subr.mxu0 0.0
    %1168 = vmatpush1.msra.mxu0 0.0
    %1169 = vmatprep.subr.mxu0 0.0
    %1170 = vmatpush1.msra.mxu0 0.0
    %1171 = vmatprep.subr.mxu0 0.0
    %1172 = vmatpush1.msra.mxu0 0.0
    %1173 = vmatprep.subr.mxu0 0.0
    %1174 = vmatpush1.msra.mxu0 0.0
    %1175 = vmatprep.mubr.f32.mxu0 0.0
    %1176 = vmatmul.mubr.f32.gmra.mrb[0].mxu0 %v1109
    %v1177 = vpop.f32.mrb[0].mxu0
    %v1178 = vadd.f32 0.0, %v1177
    %v1179 = vpop.f32.mrb[0].mxu0
    %1180 = vdwg.mxu0
    %v1182 = vsel %vm946, %v1029, 0
    %1184 = vmatprep.subr.mxu0 0.0
    %1185 = vmatpush1.msra.mxu0 %v39
    %1186 = vmatprep.subr.mxu0 0.0
    %1187 = vmatpush1.msra.mxu0 0.0
    %1188 = vmatprep.subr.mxu0 0.0
    %1189 = vmatpush1.msra.mxu0 0.0
    %1190 = vmatprep.subr.mxu0 0.0
    %1191 = vmatpush1.msra.mxu0 0.0
    %1192 = vmatprep.subr.mxu0 0.0
    %1193 = vmatpush1.msra.mxu0 0.0
    %1194 = vmatprep.subr.mxu0 0.0
    %1195 = vmatpush1.msra.mxu0 0.0
    %1196 = vmatprep.subr.mxu0 0.0
    %1197 = vmatpush1.msra.mxu0 0.0
    %1198 = vmatprep.subr.mxu0 0.0
    %1199 = vmatpush1.msra.mxu0 0.0
    %1200 = vmatprep.subr.mxu0 0.0
    %1201 = vmatpush1.msra.mxu0 0.0
    %1202 = vmatprep.subr.mxu0 0.0
    %1203 = vmatpush1.msra.mxu0 0.0
    %1204 = vmatprep.subr.mxu0 0.0
    %1205 = vmatpush1.msra.mxu0 0.0
    %1206 = vmatprep.subr.mxu0 0.0
    %1207 = vmatpush1.msra.mxu0 0.0
    %1208 = vmatprep.subr.mxu0 0.0
    %1209 = vmatpush1.msra.mxu0 0.0
    %1210 = vmatprep.subr.mxu0 0.0
    %1211 = vmatpush1.msra.mxu0 0.0
    %1212 = vmatprep.subr.mxu0 0.0
    %1213 = vmatpush1.msra.mxu0 0.0
    %1214 = vmatprep.subr.mxu0 0.0
    %1215 = vmatpush1.msra.mxu0 0.0
    %1216 = vmatprep.subr.mxu0 0.0
    %1217 = vmatpush1.msra.mxu0 0.0
    %1218 = vmatprep.subr.mxu0 0.0
    %1219 = vmatpush1.msra.mxu0 0.0
    %1220 = vmatprep.subr.mxu0 0.0
    %1221 = vmatpush1.msra.mxu0 0.0
    %1222 = vmatprep.subr.mxu0 0.0
    %1223 = vmatpush1.msra.mxu0 0.0
    %1224 = vmatprep.subr.mxu0 0.0
    %1225 = vmatpush1.msra.mxu0 0.0
    %1226 = vmatprep.subr.mxu0 0.0
    %1227 = vmatpush1.msra.mxu0 0.0
    %1228 = vmatprep.subr.mxu0 0.0
    %1229 = vmatpush1.msra.mxu0 0.0
    %1230 = vmatprep.subr.mxu0 0.0
    %1231 = vmatpush1.msra.mxu0 0.0
    %1232 = vmatprep.subr.mxu0 0.0
    %1233 = vmatpush1.msra.mxu0 0.0
    %1234 = vmatprep.subr.mxu0 0.0
    %1235 = vmatpush1.msra.mxu0 0.0
    %1236 = vmatprep.subr.mxu0 0.0
    %1237 = vmatpush1.msra.mxu0 0.0
    %1238 = vmatprep.subr.mxu0 0.0
    %1239 = vmatpush1.msra.mxu0 0.0
    %1240 = vmatprep.subr.mxu0 0.0
    %1241 = vmatpush1.msra.mxu0 0.0
    %1242 = vmatprep.subr.mxu0 0.0
    %1243 = vmatpush1.msra.mxu0 0.0
    %1244 = vmatprep.subr.mxu0 0.0
    %1245 = vmatpush1.msra.mxu0 0.0
    %1246 = vmatprep.subr.mxu0 0.0
    %1247 = vmatpush1.msra.mxu0 0.0
    %1248 = vmatprep.mubr.f32.mxu0 0.0
    %1249 = vmatmul.mubr.f32.gmra.mrb[0].mxu0 %v1182
    %v1250 = vpop.f32.mrb[0].mxu0
    %v1251 = vadd.f32 0.0, %v1250
    %v1252 = vpop.f32.mrb[0].mxu0
    %1253 = vdwg.mxu0
    %v1255 = vsel %vm946, %v1030, 0
    %1257 = vmatprep.subr.mxu0 0.0
    %1258 = vmatpush1.msra.mxu0 %v40
    %1259 = vmatprep.subr.mxu0 0.0
    %1260 = vmatpush1.msra.mxu0 0.0
    %1261 = vmatprep.subr.mxu0 0.0
    %1262 = vmatpush1.msra.mxu0 0.0
    %1263 = vmatprep.subr.mxu0 0.0
    %1264 = vmatpush1.msra.mxu0 0.0
    %1265 = vmatprep.subr.mxu0 0.0
    %1266 = vmatpush1.msra.mxu0 0.0
    %1267 = vmatprep.subr.mxu0 0.0
    %1268 = vmatpush1.msra.mxu0 0.0
    %1269 = vmatprep.subr.mxu0 0.0
    %1270 = vmatpush1.msra.mxu0 0.0
    %1271 = vmatprep.subr.mxu0 0.0
    %1272 = vmatpush1.msra.mxu0 0.0
    %1273 = vmatprep.subr.mxu0 0.0
    %1274 = vmatpush1.msra.mxu0 0.0
    %1275 = vmatprep.subr.mxu0 0.0
    %1276 = vmatpush1.msra.mxu0 0.0
    %1277 = vmatprep.subr.mxu0 0.0
    %1278 = vmatpush1.msra.mxu0 0.0
    %1279 = vmatprep.subr.mxu0 0.0
    %1280 = vmatpush1.msra.mxu0 0.0
    %1281 = vmatprep.subr.mxu0 0.0
    %1282 = vmatpush1.msra.mxu0 0.0
    %1283 = vmatprep.subr.mxu0 0.0
    %1284 = vmatpush1.msra.mxu0 0.0
    %1285 = vmatprep.subr.mxu0 0.0
    %1286 = vmatpush1.msra.mxu0 0.0
    %1287 = vmatprep.subr.mxu0 0.0
    %1288 = vmatpush1.msra.mxu0 0.0
    %1289 = vmatprep.subr.mxu0 0.0
    %1290 = vmatpush1.msra.mxu0 0.0
    %1291 = vmatprep.subr.mxu0 0.0
    %1292 = vmatpush1.msra.mxu0 0.0
    %1293 = vmatprep.subr.mxu0 0.0
    %1294 = vmatpush1.msra.mxu0 0.0
    %1295 = vmatprep.subr.mxu0 0.0
    %1296 = vmatpush1.msra.mxu0 0.0
    %1297 = vmatprep.subr.mxu0 0.0
    %1298 = vmatpush1.msra.mxu0 0.0
    %1299 = vmatprep.subr.mxu0 0.0
    %1300 = vmatpush1.msra.mxu0 0.0
    %1301 = vmatprep.subr.mxu0 0.0
    %1302 = vmatpush1.msra.mxu0 0.0
    %1303 = vmatprep.subr.mxu0 0.0
    %1304 = vmatpush1.msra.mxu0 0.0
    %1305 = vmatprep.subr.mxu0 0.0
    %1306 = vmatpush1.msra.mxu0 0.0
    %1307 = vmatprep.subr.mxu0 0.0
    %1308 = vmatpush1.msra.mxu0 0.0
    %1309 = vmatprep.subr.mxu0 0.0
    %1310 = vmatpush1.msra.mxu0 0.0
    %1311 = vmatprep.subr.mxu0 0.0
    %1312 = vmatpush1.msra.mxu0 0.0
    %1313 = vmatprep.subr.mxu0 0.0
    %1314 = vmatpush1.msra.mxu0 0.0
    %1315 = vmatprep.subr.mxu0 0.0
    %1316 = vmatpush1.msra.mxu0 0.0
    %1317 = vmatprep.subr.mxu0 0.0
    %1318 = vmatpush1.msra.mxu0 0.0
    %1319 = vmatprep.subr.mxu0 0.0
    %1320 = vmatpush1.msra.mxu0 0.0
    %1321 = vmatprep.mubr.f32.mxu0 0.0
    %1322 = vmatmul.mubr.f32.gmra.mrb[0].mxu0 %v1255
    %v1323 = vpop.f32.mrb[0].mxu0
    %v1324 = vadd.f32 0.0, %v1323
    %v1325 = vpop.f32.mrb[0].mxu0
    %1326 = vdwg.mxu0
    %v1328 = vsel %vm946, %v1031, 0
    %1330 = vmatprep.subr.mxu0 0.0
    %1331 = vmatpush1.msra.mxu0 %v41
    %1332 = vmatprep.subr.mxu0 0.0
    %1333 = vmatpush1.msra.mxu0 0.0
    %1334 = vmatprep.subr.mxu0 0.0
    %1335 = vmatpush1.msra.mxu0 0.0
    %1336 = vmatprep.subr.mxu0 0.0
    %1337 = vmatpush1.msra.mxu0 0.0
    %1338 = vmatprep.subr.mxu0 0.0
    %1339 = vmatpush1.msra.mxu0 0.0
    %1340 = vmatprep.subr.mxu0 0.0
    %1341 = vmatpush1.msra.mxu0 0.0
    %1342 = vmatprep.subr.mxu0 0.0
    %1343 = vmatpush1.msra.mxu0 0.0
    %1344 = vmatprep.subr.mxu0 0.0
    %1345 = vmatpush1.msra.mxu0 0.0
    %1346 = vmatprep.subr.mxu0 0.0
    %1347 = vmatpush1.msra.mxu0 0.0
    %1348 = vmatprep.subr.mxu0 0.0
    %1349 = vmatpush1.msra.mxu0 0.0
    %1350 = vmatprep.subr.mxu0 0.0
    %1351 = vmatpush1.msra.mxu0 0.0
    %1352 = vmatprep.subr.mxu0 0.0
    %1353 = vmatpush1.msra.mxu0 0.0
    %1354 = vmatprep.subr.mxu0 0.0
    %1355 = vmatpush1.msra.mxu0 0.0
    %1356 = vmatprep.subr.mxu0 0.0
    %1357 = vmatpush1.msra.mxu0 0.0
    %1358 = vmatprep.subr.mxu0 0.0
    %1359 = vmatpush1.msra.mxu0 0.0
    %1360 = vmatprep.subr.mxu0 0.0
    %1361 = vmatpush1.msra.mxu0 0.0
    %1362 = vmatprep.subr.mxu0 0.0
    %1363 = vmatpush1.msra.mxu0 0.0
    %1364 = vmatprep.subr.mxu0 0.0
    %1365 = vmatpush1.msra.mxu0 0.0
    %1366 = vmatprep.subr.mxu0 0.0
    %1367 = vmatpush1.msra.mxu0 0.0
    %1368 = vmatprep.subr.mxu0 0.0
    %1369 = vmatpush1.msra.mxu0 0.0
    %1370 = vmatprep.subr.mxu0 0.0
    %1371 = vmatpush1.msra.mxu0 0.0
    %1372 = vmatprep.subr.mxu0 0.0
    %1373 = vmatpush1.msra.mxu0 0.0
    %1374 = vmatprep.subr.mxu0 0.0
    %1375 = vmatpush1.msra.mxu0 0.0
    %1376 = vmatprep.subr.mxu0 0.0
    %1377 = vmatpush1.msra.mxu0 0.0
    %1378 = vmatprep.subr.mxu0 0.0
    %1379 = vmatpush1.msra.mxu0 0.0
    %1380 = vmatprep.subr.mxu0 0.0
    %1381 = vmatpush1.msra.mxu0 0.0
    %1382 = vmatprep.subr.mxu0 0.0
    %1383 = vmatpush1.msra.mxu0 0.0
    %1384 = vmatprep.subr.mxu0 0.0
    %1385 = vmatpush1.msra.mxu0 0.0
    %1386 = vmatprep.subr.mxu0 0.0
    %1387 = vmatpush1.msra.mxu0 0.0
    %1388 = vmatprep.subr.mxu0 0.0
    %1389 = vmatpush1.msra.mxu0 0.0
    %1390 = vmatprep.subr.mxu0 0.0
    %1391 = vmatpush1.msra.mxu0 0.0
    %1392 = vmatprep.subr.mxu0 0.0
    %1393 = vmatpush1.msra.mxu0 0.0
    %1394 = vmatprep.mubr.f32.mxu0 0.0
    %1395 = vmatmul.mubr.f32.gmra.mrb[0].mxu0 %v1328
    %v1396 = vpop.f32.mrb[0].mxu0
    %v1397 = vadd.f32 0.0, %v1396
    %v1398 = vpop.f32.mrb[0].mxu0
    %1399 = vdwg.mxu0
    %v1401 = vsel %vm946, %v1032, 0
    %1403 = vmatprep.subr.mxu0 0.0
    %1404 = vmatpush1.msra.mxu0 %v42
    %1405 = vmatprep.subr.mxu0 0.0
    %1406 = vmatpush1.msra.mxu0 0.0
    %1407 = vmatprep.subr.mxu0 0.0
    %1408 = vmatpush1.msra.mxu0 0.0
    %1409 = vmatprep.subr.mxu0 0.0
    %1410 = vmatpush1.msra.mxu0 0.0
    %1411 = vmatprep.subr.mxu0 0.0
    %1412 = vmatpush1.msra.mxu0 0.0
    %1413 = vmatprep.subr.mxu0 0.0
    %1414 = vmatpush1.msra.mxu0 0.0
    %1415 = vmatprep.subr.mxu0 0.0
    %1416 = vmatpush1.msra.mxu0 0.0
    %1417 = vmatprep.subr.mxu0 0.0
    %1418 = vmatpush1.msra.mxu0 0.0
    %1419 = vmatprep.subr.mxu0 0.0
    %1420 = vmatpush1.msra.mxu0 0.0
    %1421 = vmatprep.subr.mxu0 0.0
    %1422 = vmatpush1.msra.mxu0 0.0
    %1423 = vmatprep.subr.mxu0 0.0
    %1424 = vmatpush1.msra.mxu0 0.0
    %1425 = vmatprep.subr.mxu0 0.0
    %1426 = vmatpush1.msra.mxu0 0.0
    %1427 = vmatprep.subr.mxu0 0.0
    %1428 = vmatpush1.msra.mxu0 0.0
    %1429 = vmatprep.subr.mxu0 0.0
    %1430 = vmatpush1.msra.mxu0 0.0
    %1431 = vmatprep.subr.mxu0 0.0
    %1432 = vmatpush1.msra.mxu0 0.0
    %1433 = vmatprep.subr.mxu0 0.0
    %1434 = vmatpush1.msra.mxu0 0.0
    %1435 = vmatprep.subr.mxu0 0.0
    %1436 = vmatpush1.msra.mxu0 0.0
    %1437 = vmatprep.subr.mxu0 0.0
    %1438 = vmatpush1.msra.mxu0 0.0
    %1439 = vmatprep.subr.mxu0 0.0
    %1440 = vmatpush1.msra.mxu0 0.0
    %1441 = vmatprep.subr.mxu0 0.0
    %1442 = vmatpush1.msra.mxu0 0.0
    %1443 = vmatprep.subr.mxu0 0.0
    %1444 = vmatpush1.msra.mxu0 0.0
    %1445 = vmatprep.subr.mxu0 0.0
    %1446 = vmatpush1.msra.mxu0 0.0
    %1447 = vmatprep.subr.mxu0 0.0
    %1448 = vmatpush1.msra.mxu0 0.0
    %1449 = vmatprep.subr.mxu0 0.0
    %1450 = vmatpush1.msra.mxu0 0.0
    %1451 = vmatprep.subr.mxu0 0.0
    %1452 = vmatpush1.msra.mxu0 0.0
    %1453 = vmatprep.subr.mxu0 0.0
    %1454 = vmatpush1.msra.mxu0 0.0
    %1455 = vmatprep.subr.mxu0 0.0
    %1456 = vmatpush1.msra.mxu0 0.0
    %1457 = vmatprep.subr.mxu0 0.0
    %1458 = vmatpush1.msra.mxu0 0.0
    %1459 = vmatprep.subr.mxu0 0.0
    %1460 = vmatpush1.msra.mxu0 0.0
    %1461 = vmatprep.subr.mxu0 0.0
    %1462 = vmatpush1.msra.mxu0 0.0
    %1463 = vmatprep.subr.mxu0 0.0
    %1464 = vmatpush1.msra.mxu0 0.0
    %1465 = vmatprep.subr.mxu0 0.0
    %1466 = vmatpush1.msra.mxu0 0.0
    %1467 = vmatprep.mubr.f32.mxu0 0.0
    %1468 = vmatmul.mubr.f32.gmra.mrb[0].mxu0 %v1401
    %v1469 = vpop.f32.mrb[0].mxu0
    %v1470 = vadd.f32 0.0, %v1469
    %v1471 = vpop.f32.mrb[0].mxu0
    %1472 = vdwg.mxu0
    %v1474 = vsel %vm946, %v1033, 0
    %1476 = vmatprep.subr.mxu0 0.0
    %1477 = vmatpush1.msra.mxu0 %v43
    %1478 = vmatprep.subr.mxu0 0.0
    %1479 = vmatpush1.msra.mxu0 0.0
    %1480 = vmatprep.subr.mxu0 0.0
    %1481 = vmatpush1.msra.mxu0 0.0
    %1482 = vmatprep.subr.mxu0 0.0
    %1483 = vmatpush1.msra.mxu0 0.0
    %1484 = vmatprep.subr.mxu0 0.0
    %1485 = vmatpush1.msra.mxu0 0.0
    %1486 = vmatprep.subr.mxu0 0.0
    %1487 = vmatpush1.msra.mxu0 0.0
    %1488 = vmatprep.subr.mxu0 0.0
    %1489 = vmatpush1.msra.mxu0 0.0
    %1490 = vmatprep.subr.mxu0 0.0
    %1491 = vmatpush1.msra.mxu0 0.0
    %1492 = vmatprep.subr.mxu0 0.0
    %1493 = vmatpush1.msra.mxu0 0.0
    %1494 = vmatprep.subr.mxu0 0.0
    %1495 = vmatpush1.msra.mxu0 0.0
    %1496 = vmatprep.subr.mxu0 0.0
    %1497 = vmatpush1.msra.mxu0 0.0
    %1498 = vmatprep.subr.mxu0 0.0
    %1499 = vmatpush1.msra.mxu0 0.0
    %1500 = vmatprep.subr.mxu0 0.0
    %1501 = vmatpush1.msra.mxu0 0.0
    %1502 = vmatprep.subr.mxu0 0.0
    %1503 = vmatpush1.msra.mxu0 0.0
    %1504 = vmatprep.subr.mxu0 0.0
    %1505 = vmatpush1.msra.mxu0 0.0
    %1506 = vmatprep.subr.mxu0 0.0
    %1507 = vmatpush1.msra.mxu0 0.0
    %1508 = vmatprep.subr.mxu0 0.0
    %1509 = vmatpush1.msra.mxu0 0.0
    %1510 = vmatprep.subr.mxu0 0.0
    %1511 = vmatpush1.msra.mxu0 0.0
    %1512 = vmatprep.subr.mxu0 0.0
    %1513 = vmatpush1.msra.mxu0 0.0
    %1514 = vmatprep.subr.mxu0 0.0
    %1515 = vmatpush1.msra.mxu0 0.0
    %1516 = vmatprep.subr.mxu0 0.0
    %1517 = vmatpush1.msra.mxu0 0.0
    %1518 = vmatprep.subr.mxu0 0.0
    %1519 = vmatpush1.msra.mxu0 0.0
    %1520 = vmatprep.subr.mxu0 0.0
    %1521 = vmatpush1.msra.mxu0 0.0
    %1522 = vmatprep.subr.mxu0 0.0
    %1523 = vmatpush1.msra.mxu0 0.0
    %1524 = vmatprep.subr.mxu0 0.0
    %1525 = vmatpush1.msra.mxu0 0.0
    %1526 = vmatprep.subr.mxu0 0.0
    %1527 = vmatpush1.msra.mxu0 0.0
    %1528 = vmatprep.subr.mxu0 0.0
    %1529 = vmatpush1.msra.mxu0 0.0
    %1530 = vmatprep.subr.mxu0 0.0
    %1531 = vmatpush1.msra.mxu0 0.0
    %1532 = vmatprep.subr.mxu0 0.0
    %1533 = vmatpush1.msra.mxu0 0.0
    %1534 = vmatprep.subr.mxu0 0.0
    %1535 = vmatpush1.msra.mxu0 0.0
    %1536 = vmatprep.subr.mxu0 0.0
    %1537 = vmatpush1.msra.mxu0 0.0
    %1538 = vmatprep.subr.mxu0 0.0
    %1539 = vmatpush1.msra.mxu0 0.0
    %1540 = vmatprep.mubr.f32.mxu0 0.0
    %1541 = vmatmul.mubr.f32.gmra.mrb[0].mxu0 %v1474
    %v1542 = vpop.f32.mrb[0].mxu0
    %v1543 = vadd.f32 0.0, %v1542
    %v1544 = vpop.f32.mrb[0].mxu0
    %1545 = vdwg.mxu0
    %v1547 = vsel %vm946, %v1034, 0
    %1549 = vmatprep.subr.mxu0 0.0
    %1550 = vmatpush1.msra.mxu0 %v44
    %1551 = vmatprep.subr.mxu0 0.0
    %1552 = vmatpush1.msra.mxu0 0.0
    %1553 = vmatprep.subr.mxu0 0.0
    %1554 = vmatpush1.msra.mxu0 0.0
    %1555 = vmatprep.subr.mxu0 0.0
    %1556 = vmatpush1.msra.mxu0 0.0
    %1557 = vmatprep.subr.mxu0 0.0
    %1558 = vmatpush1.msra.mxu0 0.0
    %1559 = vmatprep.subr.mxu0 0.0
    %1560 = vmatpush1.msra.mxu0 0.0
    %1561 = vmatprep.subr.mxu0 0.0
    %1562 = vmatpush1.msra.mxu0 0.0
    %1563 = vmatprep.subr.mxu0 0.0
    %1564 = vmatpush1.msra.mxu0 0.0
    %1565 = vmatprep.subr.mxu0 0.0
    %1566 = vmatpush1.msra.mxu0 0.0
    %1567 = vmatprep.subr.mxu0 0.0
    %1568 = vmatpush1.msra.mxu0 0.0
    %1569 = vmatprep.subr.mxu0 0.0
    %1570 = vmatpush1.msra.mxu0 0.0
    %1571 = vmatprep.subr.mxu0 0.0
    %1572 = vmatpush1.msra.mxu0 0.0
    %1573 = vmatprep.subr.mxu0 0.0
    %1574 = vmatpush1.msra.mxu0 0.0
    %1575 = vmatprep.subr.mxu0 0.0
    %1576 = vmatpush1.msra.mxu0 0.0
    %1577 = vmatprep.subr.mxu0 0.0
    %1578 = vmatpush1.msra.mxu0 0.0
    %1579 = vmatprep.subr.mxu0 0.0
    %1580 = vmatpush1.msra.mxu0 0.0
    %1581 = vmatprep.subr.mxu0 0.0
    %1582 = vmatpush1.msra.mxu0 0.0
    %1583 = vmatprep.subr.mxu0 0.0
    %1584 = vmatpush1.msra.mxu0 0.0
    %1585 = vmatprep.subr.mxu0 0.0
    %1586 = vmatpush1.msra.mxu0 0.0
    %1587 = vmatprep.subr.mxu0 0.0
    %1588 = vmatpush1.msra.mxu0 0.0
    %1589 = vmatprep.subr.mxu0 0.0
    %1590 = vmatpush1.msra.mxu0 0.0
    %1591 = vmatprep.subr.mxu0 0.0
    %1592 = vmatpush1.msra.mxu0 0.0
    %1593 = vmatprep.subr.mxu0 0.0
    %1594 = vmatpush1.msra.mxu0 0.0
    %1595 = vmatprep.subr.mxu0 0.0
    %1596 = vmatpush1.msra.mxu0 0.0
    %1597 = vmatprep.subr.mxu0 0.0
    %1598 = vmatpush1.msra.mxu0 0.0
    %1599 = vmatprep.subr.mxu0 0.0
    %1600 = vmatpush1.msra.mxu0 0.0
    %1601 = vmatprep.subr.mxu0 0.0
    %1602 = vmatpush1.msra.mxu0 0.0
    %1603 = vmatprep.subr.mxu0 0.0
    %1604 = vmatpush1.msra.mxu0 0.0
    %1605 = vmatprep.subr.mxu0 0.0
    %1606 = vmatpush1.msra.mxu0 0.0
    %1607 = vmatprep.subr.mxu0 0.0
    %1608 = vmatpush1.msra.mxu0 0.0
    %1609 = vmatprep.subr.mxu0 0.0
    %1610 = vmatpush1.msra.mxu0 0.0
    %1611 = vmatprep.subr.mxu0 0.0
    %1612 = vmatpush1.msra.mxu0 0.0
    %1613 = vmatprep.mubr.f32.mxu0 0.0
    %1614 = vmatmul.mubr.f32.gmra.mrb[0].mxu0 %v1547
    %v1615 = vpop.f32.mrb[0].mxu0
    %v1616 = vadd.f32 0.0, %v1615
    %v1617 = vpop.f32.mrb[0].mxu0
    %1618 = vdwg.mxu0
    %v1619 = vld [vmem:[%s6] sm:$0xff]
    %v1620 = vld [vmem:[%s6 + $0x8] sm:$0xff]
    %v1621 = vld [vmem:[%s6 + $0x10] sm:$0xff]
    %v1622 = vld [vmem:[%s6 + $0x18] sm:$0xff]
    %v1623 = vld [vmem:[%s7] sm:$0xff]
    %v1624 = vld [vmem:[%s7 + $0x8] sm:$0xff]
    %v1625 = vld [vmem:[%s7 + $0x10] sm:$0xff]
    %v1626 = vld [vmem:[%s7 + $0x18] sm:$0xff]
    %v1628 = vsel %vm49, %v1397, 0
    %v1631 = vsel %vm49, %v1470, 0
    %v1634 = vsel %vm49, %v1543, 0
    %v1637 = vsel %vm49, %v1616, 0
    %1639 = vmatprep.subr.mxu0 0.0
    %1640 = vmatpush1.msra.mxu0 %v1623
    %1641 = vmatprep.subr.mxu0 0.0
    %1642 = vmatpush1.msra.mxu0 %v1624
    %1643 = vmatprep.subr.mxu0 0.0
    %1644 = vmatpush1.msra.mxu0 %v1625
    %1645 = vmatprep.subr.mxu0 0.0
    %1646 = vmatpush1.msra.mxu0 %v1626
    %1647 = vmatprep.subr.mxu0 0.0
    %1648 = vmatpush1.msra.mxu0 0.0
    %1649 = vmatprep.subr.mxu0 0.0
    %1650 = vmatpush1.msra.mxu0 0.0
    %1651 = vmatprep.subr.mxu0 0.0
    %1652 = vmatpush1.msra.mxu0 0.0
    %1653 = vmatprep.subr.mxu0 0.0
    %1654 = vmatpush1.msra.mxu0 0.0
    %1655 = vmatprep.subr.mxu0 0.0
    %1656 = vmatpush1.msra.mxu0 0.0
    %1657 = vmatprep.subr.mxu0 0.0
    %1658 = vmatpush1.msra.mxu0 0.0
    %1659 = vmatprep.subr.mxu0 0.0
    %1660 = vmatpush1.msra.mxu0 0.0
    %1661 = vmatprep.subr.mxu0 0.0
    %1662 = vmatpush1.msra.mxu0 0.0
    %1663 = vmatprep.subr.mxu0 0.0
    %1664 = vmatpush1.msra.mxu0 0.0
    %1665 = vmatprep.subr.mxu0 0.0
    %1666 = vmatpush1.msra.mxu0 0.0
    %1667 = vmatprep.subr.mxu0 0.0
    %1668 = vmatpush1.msra.mxu0 0.0
    %1669 = vmatprep.subr.mxu0 0.0
    %1670 = vmatpush1.msra.mxu0 0.0
    %1671 = vmatprep.subr.mxu0 0.0
    %1672 = vmatpush1.msra.mxu0 0.0
    %1673 = vmatprep.subr.mxu0 0.0
    %1674 = vmatpush1.msra.mxu0 0.0
    %1675 = vmatprep.subr.mxu0 0.0
    %1676 = vmatpush1.msra.mxu0 0.0
    %1677 = vmatprep.subr.mxu0 0.0
    %1678 = vmatpush1.msra.mxu0 0.0
    %1679 = vmatprep.subr.mxu0 0.0
    %1680 = vmatpush1.msra.mxu0 0.0
    %1681 = vmatprep.subr.mxu0 0.0
    %1682 = vmatpush1.msra.mxu0 0.0
    %1683 = vmatprep.subr.mxu0 0.0
    %1684 = vmatpush1.msra.mxu0 0.0
    %1685 = vmatprep.subr.mxu0 0.0
    %1686 = vmatpush1.msra.mxu0 0.0
    %1687 = vmatprep.subr.mxu0 0.0
    %1688 = vmatpush1.msra.mxu0 0.0
    %1689 = vmatprep.subr.mxu0 0.0
    %1690 = vmatpush1.msra.mxu0 0.0
    %1691 = vmatprep.subr.mxu0 0.0
    %1692 = vmatpush1.msra.mxu0 0.0
    %1693 = vmatprep.subr.mxu0 0.0
    %1694 = vmatpush1.msra.mxu0 0.0
    %1695 = vmatprep.subr.mxu0 0.0
    %1696 = vmatpush1.msra.mxu0 0.0
    %1697 = vmatprep.subr.mxu0 0.0
    %1698 = vmatpush1.msra.mxu0 0.0
    %1699 = vmatprep.subr.mxu0 0.0
    %1700 = vmatpush1.msra.mxu0 0.0
    %1701 = vmatprep.subr.mxu0 0.0
    %1702 = vmatpush1.msra.mxu0 0.0
    %1703 = vmatprep.mubr.f32.mxu0 0.0
    %1704 = vmatmul.mubr.f32.gmra.mrb[0].mxu0 %v1628
    %v1705 = vpop.f32.mrb[0].mxu0
    %v1706 = vadd.f32 0.0, %v1705
    %v1707 = vpop.f32.mrb[0].mxu0
    %1708 = vmatprep.mubr.f32.mxu0 0.0
    %1709 = vmatmul.mubr.f32.gmra.mrb[0].mxu0 %v1631
    %v1710 = vpop.f32.mrb[0].mxu0
    %v1711 = vadd.f32 0.0, %v1710
    %v1712 = vpop.f32.mrb[0].mxu0
    %1713 = vmatprep.mubr.f32.mxu0 0.0
    %1714 = vmatmul.mubr.f32.gmra.mrb[0].mxu0 %v1634
    %v1715 = vpop.f32.mrb[0].mxu0
    %v1716 = vadd.f32 0.0, %v1715
    %v1717 = vpop.f32.mrb[0].mxu0
    %1718 = vmatprep.mubr.f32.mxu0 0.0
    %1719 = vmatmul.mubr.f32.gmra.mrb[0].mxu0 %v1637
    %v1720 = vpop.f32.mrb[0].mxu0
    %v1721 = vadd.f32 0.0, %v1720
    %v1722 = vpop.f32.mrb[0].mxu0
    %1723 = vdwg.mxu0
    %v1725 = vsel %vm49, %v1105, 0
    %v1728 = vsel %vm49, %v1178, 0
    %v1731 = vsel %vm49, %v1251, 0
    %v1734 = vsel %vm49, %v1324, 0
    %1736 = vmatprep.subr.mxu0 0.0
    %1737 = vmatpush1.msra.mxu0 %v1619
    %1738 = vmatprep.subr.mxu0 0.0
    %1739 = vmatpush1.msra.mxu0 %v1620
    %1740 = vmatprep.subr.mxu0 0.0
    %1741 = vmatpush1.msra.mxu0 %v1621
    %1742 = vmatprep.subr.mxu0 0.0
    %1743 = vmatpush1.msra.mxu0 %v1622
    %1744 = vmatprep.subr.mxu0 0.0
    %1745 = vmatpush1.msra.mxu0 0.0
    %1746 = vmatprep.subr.mxu0 0.0
    %1747 = vmatpush1.msra.mxu0 0.0
    %1748 = vmatprep.subr.mxu0 0.0
    %1749 = vmatpush1.msra.mxu0 0.0
    %1750 = vmatprep.subr.mxu0 0.0
    %1751 = vmatpush1.msra.mxu0 0.0
    %1752 = vmatprep.subr.mxu0 0.0
    %1753 = vmatpush1.msra.mxu0 0.0
    %1754 = vmatprep.subr.mxu0 0.0
    %1755 = vmatpush1.msra.mxu0 0.0
    %1756 = vmatprep.subr.mxu0 0.0
    %1757 = vmatpush1.msra.mxu0 0.0
    %1758 = vmatprep.subr.mxu0 0.0
    %1759 = vmatpush1.msra.mxu0 0.0
    %1760 = vmatprep.subr.mxu0 0.0
    %1761 = vmatpush1.msra.mxu0 0.0
    %1762 = vmatprep.subr.mxu0 0.0
    %1763 = vmatpush1.msra.mxu0 0.0
    %1764 = vmatprep.subr.mxu0 0.0
    %1765 = vmatpush1.msra.mxu0 0.0
    %1766 = vmatprep.subr.mxu0 0.0
    %1767 = vmatpush1.msra.mxu0 0.0
    %1768 = vmatprep.subr.mxu0 0.0
    %1769 = vmatpush1.msra.mxu0 0.0
    %1770 = vmatprep.subr.mxu0 0.0
    %1771 = vmatpush1.msra.mxu0 0.0
    %1772 = vmatprep.subr.mxu0 0.0
    %1773 = vmatpush1.msra.mxu0 0.0
    %1774 = vmatprep.subr.mxu0 0.0
    %1775 = vmatpush1.msra.mxu0 0.0
    %1776 = vmatprep.subr.mxu0 0.0
    %1777 = vmatpush1.msra.mxu0 0.0
    %1778 = vmatprep.subr.mxu0 0.0
    %1779 = vmatpush1.msra.mxu0 0.0
    %1780 = vmatprep.subr.mxu0 0.0
    %1781 = vmatpush1.msra.mxu0 0.0
    %1782 = vmatprep.subr.mxu0 0.0
    %1783 = vmatpush1.msra.mxu0 0.0
    %1784 = vmatprep.subr.mxu0 0.0
    %1785 = vmatpush1.msra.mxu0 0.0
    %1786 = vmatprep.subr.mxu0 0.0
    %1787 = vmatpush1.msra.mxu0 0.0
    %1788 = vmatprep.subr.mxu0 0.0
    %1789 = vmatpush1.msra.mxu0 0.0
    %1790 = vmatprep.subr.mxu0 0.0
    %1791 = vmatpush1.msra.mxu0 0.0
    %1792 = vmatprep.subr.mxu0 0.0
    %1793 = vmatpush1.msra.mxu0 0.0
    %1794 = vmatprep.subr.mxu0 0.0
    %1795 = vmatpush1.msra.mxu0 0.0
    %1796 = vmatprep.subr.mxu0 0.0
    %1797 = vmatpush1.msra.mxu0 0.0
    %1798 = vmatprep.subr.mxu0 0.0
    %1799 = vmatpush1.msra.mxu0 0.0
    %1800 = vmatprep.mubr.f32.mxu0 0.0
    %1801 = vmatmul.mubr.f32.gmra.mrb[0].mxu0 %v1725
    %v1802 = vpop.f32.mrb[0].mxu0
    %v1803 = vadd.f32 %v1706, %v1802
    %v1804 = vpop.f32.mrb[0].mxu0
    %1805 = vmatprep.mubr.f32.mxu0 0.0
    %1806 = vmatmul.mubr.f32.gmra.mrb[0].mxu0 %v1728
    %v1807 = vpop.f32.mrb[0].mxu0
    %v1808 = vadd.f32 %v1711, %v1807
    %v1809 = vpop.f32.mrb[0].mxu0
    %1810 = vmatprep.mubr.f32.mxu0 0.0
    %1811 = vmatmul.mubr.f32.gmra.mrb[0].mxu0 %v1731
    %v1812 = vpop.f32.mrb[0].mxu0
    %v1813 = vadd.f32 %v1716, %v1812
    %v1814 = vpop.f32.mrb[0].mxu0
    %1815 = vmatprep.mubr.f32.mxu0 0.0
    %1816 = vmatmul.mubr.f32.gmra.mrb[0].mxu0 %v1734
    %v1817 = vpop.f32.mrb[0].mxu0
    %v1818 = vadd.f32 %v1721, %v1817
    %v1819 = vpop.f32.mrb[0].mxu0
    %1820 = vdwg.mxu0
    %v1821 = vmax.f32 %v1803, 0.0
    %v1822 = vmax.f32 %v1808, 0.0
    %v1823 = vmax.f32 %v1813, 0.0
    %v1824 = vmax.f32 %v1818, 0.0
    %v1825 = vld [vmem:[%s8] sm:$0xff]
    %v1826 = vld [vmem:[%s8 + $0x8] sm:$0xff]
    %v1828 = vsel %vm349, %v1821, 0
    %v1831 = vsel %vm349, %v1822, 0
    %v1834 = vsel %vm349, %v1823, 0
    %v1837 = vsel %vm349, %v1824, 0
    %1839 = vmatprep.subr.mxu0 0.0
    %1840 = vmatpush1.msra.mxu0 %v1825
    %1841 = vmatprep.subr.mxu0 0.0
    %1842 = vmatpush1.msra.mxu0 %v1826
    %1843 = vmatprep.subr.mxu0 0.0
    %1844 = vmatpush1.msra.mxu0 0.0
    %1845 = vmatprep.subr.mxu0 0.0
    %1846 = vmatpush1.msra.mxu0 0.0
    %1847 = vmatprep.subr.mxu0 0.0
    %1848 = vmatpush1.msra.mxu0 0.0
    %1849 = vmatprep.subr.mxu0 0.0
    %1850 = vmatpush1.msra.mxu0 0.0
    %1851 = vmatprep.subr.mxu0 0.0
    %1852 = vmatpush1.msra.mxu0 0.0
    %1853 = vmatprep.subr.mxu0 0.0
    %1854 = vmatpush1.msra.mxu0 0.0
    %1855 = vmatprep.subr.mxu0 0.0
    %1856 = vmatpush1.msra.mxu0 0.0
    %1857 = vmatprep.subr.mxu0 0.0
    %1858 = vmatpush1.msra.mxu0 0.0
    %1859 = vmatprep.subr.mxu0 0.0
    %1860 = vmatpush1.msra.mxu0 0.0
    %1861 = vmatprep.subr.mxu0 0.0
    %1862 = vmatpush1.msra.mxu0 0.0
    %1863 = vmatprep.subr.mxu0 0.0
    %1864 = vmatpush1.msra.mxu0 0.0
    %1865 = vmatprep.subr.mxu0 0.0
    %1866 = vmatpush1.msra.mxu0 0.0
    %1867 = vmatprep.subr.mxu0 0.0
    %1868 = vmatpush1.msra.mxu0 0.0
    %1869 = vmatprep.subr.mxu0 0.0
    %1870 = vmatpush1.msra.mxu0 0.0
    %1871 = vmatprep.subr.mxu0 0.0
    %1872 = vmatpush1.msra.mxu0 0.0
    %1873 = vmatprep.subr.mxu0 0.0
    %1874 = vmatpush1.msra.mxu0 0.0
    %1875 = vmatprep.subr.mxu0 0.0
    %1876 = vmatpush1.msra.mxu0 0.0
    %1877 = vmatprep.subr.mxu0 0.0
    %1878 = vmatpush1.msra.mxu0 0.0
    %1879 = vmatprep.subr.mxu0 0.0
    %1880 = vmatpush1.msra.mxu0 0.0
    %1881 = vmatprep.subr.mxu0 0.0
    %1882 = vmatpush1.msra.mxu0 0.0
    %1883 = vmatprep.subr.mxu0 0.0
    %1884 = vmatpush1.msra.mxu0 0.0
    %1885 = vmatprep.subr.mxu0 0.0
    %1886 = vmatpush1.msra.mxu0 0.0
    %1887 = vmatprep.subr.mxu0 0.0
    %1888 = vmatpush1.msra.mxu0 0.0
    %1889 = vmatprep.subr.mxu0 0.0
    %1890 = vmatpush1.msra.mxu0 0.0
    %1891 = vmatprep.subr.mxu0 0.0
    %1892 = vmatpush1.msra.mxu0 0.0
    %1893 = vmatprep.subr.mxu0 0.0
    %1894 = vmatpush1.msra.mxu0 0.0
    %1895 = vmatprep.subr.mxu0 0.0
    %1896 = vmatpush1.msra.mxu0 0.0
    %1897 = vmatprep.subr.mxu0 0.0
    %1898 = vmatpush1.msra.mxu0 0.0
    %1899 = vmatprep.subr.mxu0 0.0
    %1900 = vmatpush1.msra.mxu0 0.0
    %1901 = vmatprep.subr.mxu0 0.0
    %1902 = vmatpush1.msra.mxu0 0.0
    %1903 = vmatprep.mubr.f32.mxu0 0.0
    %1904 = vmatmul.mubr.f32.gmra.mrb[0].mxu0 %v1828
    %v1905 = vpop.f32.mrb[0].mxu0
    %v1906 = vadd.f32 0.0, %v1905
    %v1907 = vpop.f32.mrb[0].mxu0
    %1908 = vmatprep.mubr.f32.mxu0 0.0
    %1909 = vmatmul.mubr.f32.gmra.mrb[0].mxu0 %v1831
    %v1910 = vpop.f32.mrb[0].mxu0
    %v1911 = vadd.f32 0.0, %v1910
    %v1912 = vpop.f32.mrb[0].mxu0
    %1913 = vmatprep.mubr.f32.mxu0 0.0
    %1914 = vmatmul.mubr.f32.gmra.mrb[0].mxu0 %v1834
    %v1915 = vpop.f32.mrb[0].mxu0
    %v1916 = vadd.f32 0.0, %v1915
    %v1917 = vpop.f32.mrb[0].mxu0
    %1918 = vmatprep.mubr.f32.mxu0 0.0
    %1919 = vmatmul.mubr.f32.gmra.mrb[0].mxu0 %v1837
    %v1920 = vpop.f32.mrb[0].mxu0
    %v1921 = vadd.f32 0.0, %v1920
    %v1922 = vpop.f32.mrb[0].mxu0
    %1923 = vdwg.mxu0
    %1924 = vst.msk [vmem:[#allocation2] sm:$0xff] %vm49, %v1906
    %1925 = vst.msk [vmem:[#allocation2 + $0x8] sm:$0xff] %vm49, %v1911
    %1926 = vst.msk [vmem:[#allocation2 + $0x10] sm:$0xff] %vm49, %v1916
    %1927 = vst.msk [vmem:[#allocation2 + $0x18] sm:$0xff] %vm49, %v1921
    // Predicated region
    $region38: #{tpu_custom_call.1} parent=1 // pred_check
      _
    $region39: #{tpu_custom_call.1} parent=1 // pred_check_branch
      %1929 = sbr.rel (0) target = $region41
    $region40: #{tpu_custom_call.1} parent=1 // pred_region
      %s1931 = ssub.s32 512, 512
      %1932 = vsyncadd [#allocation3], %s1931
      %s1933 = sshll.u32 [#allocation2], 4
      %s1934 = int_to_ptr.vmem [resolvable:$true] %s1933
      %1939 = dma.vmem_to_hbm [thread:$0]  %s1934, 512, %s9, [#allocation3], 128, 128, 8
    $region41: #{tpu_custom_call.1} parent=1 // pred_fallthru
      _
    // Predicated region
    $region42: #{tpu_custom_call.1} parent=1 // pred_check
      _
    $region43: #{tpu_custom_call.1} parent=1 // pred_check_branch
      %1941 = sbr.rel (0) target = $region45
    $region44: #{tpu_custom_call.1} parent=1 // pred_region
      %1942 = dma.done [#allocation3], 512
    $region45: #{tpu_custom_call.1} parent=1 // pred_fallthru
      _
    %1943 = vsyncpa [#allocation3], 1

</llo_original>
